<compile_context>
chip_gen: v6e
topology: v6e:2x2x1
jax: 0.10.0
libtpu: 0.0.40
codegen_flags: <defaults>
</compile_context>

<pallas_src>
import functools

import jax
import jax.numpy as jnp
import numpy as np
from jax import lax
from jax.experimental import pallas as pl
from jax.experimental.pallas import tpu as pltpu


# ----------------------------------------------------------------------------
# Pallas kernel: one grid step = Bt batch elements.
# ----------------------------------------------------------------------------
def _calayer_kernel(Bt, C, W, H, CH,
                    x_ref, s_ref, wcc_ref, bcc_ref, aaug_ref,
                    bm1_ref, b0_ref, bp1_ref, rm1_ref, rp1_ref, b3_ref,
                    out_ref, stage_ref, xoc_ref, yoc_ref):
    f32 = jnp.float32
    C1 = C + 1

    # ---------------- front end: merged, lane-dense (Bt*C, .) layout ---------
    X = x_ref[...]                                                # (Bt*C, H*W)
    # fused spatial means: xym = [x_inp | y_inp]  (one MXU matmul)
    xym = jnp.dot(X, s_ref[...], preferred_element_type=f32)      # (Bt*C, W+H)
    # concat_conv: 1x1 conv over the (W+H) axis (BN folded) + SiLU
    z = jnp.dot(xym, wcc_ref[...], preferred_element_type=f32) + bcc_ref[...]
    z = z * jax.nn.sigmoid(z)
    xm = xym[:, :W]                                               # x_inp
    stage_ref[:, :W] = z[:, :W] + xm                              # x branch
    stage_ref[:, W:] = z[:, W:] + xm        # y branch (module quirk: + x_inp)

    # constant "ones" channel used by the A_aug bilinear fold (biases + BN shift)
    xoc_ref[:, :, C:C1] = jnp.ones((CH, W, 1), f32)
    yoc_ref[:, :, C:C1] = jnp.ones((CH, H, 1), f32)

    aaug = aaug_ref[...]                                          # (CH, C1, C1)
    bm1 = bm1_ref[...]; b0 = b0_ref[...]; bp1 = bp1_ref[...]      # (CH, H, H)
    rm1 = rm1_ref[...]; rp1 = rp1_ref[...]                        # (CH, W, W)
    b3 = b3_ref[0]

    # ---------------- back end: batched over CH-image chunks -----------------
    @pl.loop(0, Bt // CH)
    def _chunk(g):
        # bridge: rows (b, c) of the stage buffer -> per-image transposed
        # (CH, W, C+1) / (CH, H, C+1) tensors (the only per-image code left).
        for j in range(CH):                                       # static, CH <= 8
            row = stage_ref[pl.ds((g * CH + j) * C, C), :]        # (C, W+H)
            xoc_ref[j, :, :C] = row[:, :W].T                      # (W, C)
            yoc_ref[j, :, :C] = row[:, W:].T                      # (H, C)
        xoc = xoc_ref[...]                                        # (CH, W, C1)
        yoc = yoc_ref[...]                                        # (CH, H, C1)

        # mask = x_conv * y_conv, hidden->1 conv + BN shift folded into A_aug
        ga = jnp.einsum('bwc,bcd->bwd', xoc, aaug,
                        preferred_element_type=f32)               # (CH, W, C1)
        m = jnp.einsum('bwd,bhd->bwh', ga, yoc,
                       preferred_element_type=f32)                # (CH, W, H)
        m = m * jax.nn.sigmoid(m)                                 # SiLU

        # 3x3 conv (padding=1): banded lane matmuls + shift-matrix row matmuls
        t_m1 = jnp.einsum('bwh,bhk->bwk', m, bm1, preferred_element_type=f32)
        t_0 = jnp.einsum('bwh,bhk->bwk', m, b0, preferred_element_type=f32)
        t_p1 = jnp.einsum('bwh,bhk->bwk', m, bp1, preferred_element_type=f32)
        conv = (jnp.einsum('bvw,bwk->bvk', rm1, t_m1, preferred_element_type=f32)
                + t_0
                + jnp.einsum('bvw,bwk->bvk', rp1, t_p1, preferred_element_type=f32)
                + b3)
        out_ref[pl.ds(g * CH, CH), :, :] = jax.nn.sigmoid(conv).astype(out_ref.dtype)


# ----------------------------------------------------------------------------
# Wrapper: parameter folding (glue) + pallas_call
# ----------------------------------------------------------------------------
def _pick_batch_tile(B, C, H, W, itemsize, target_bytes=512 * 1024):
    """Largest legal batch tile with a ~target-sized input block; prefers >= 2
    grid steps so the 'parallel' axis can shard across v7x's two TensorCores."""
    per_image = C * H * W * itemsize
    target = max(1, target_bytes // per_image)
    cands = [bt for bt in range(1, B + 1)
             if B % bt == 0 and ((bt * C) % 8 == 0 or bt == B)]
    multi = [bt for bt in cands if bt <= target and B // bt >= 2]
    if multi:
        return max(multi)
    small = [bt for bt in cands if bt <= target]
    if small:
        return max(small)
    return min(cands)                      # bt == B is always layout-legal


def _pad(n, m):
    return ((n + m - 1) // m) * m


def calayer_pallas(inp_nchw, p, *, width, height, in_channels, hidden):
    B, C, H, W = inp_nchw.shape
    assert (C, H, W) == (in_channels, height, width)
    # The module's `y_out = z[W:] + x_inp` residual (adds x_inp, not y_inp) is
    # only shape-consistent when width == height; we replicate that quirk.
    assert W == H, "calayer requires width == height"
    eps = 1e-5
    f32 = jnp.float32
    hp = lax.Precision.HIGHEST
    itemsize = inp_nchw.dtype.itemsize

    Bt = _pick_batch_tile(B, C, H, W, itemsize)
    CH = max(g for g in (8, 4, 2, 1) if Bt % g == 0)   # back-end chunk size
    C1 = C + 1

    # Averaging/selection matrix: row index p = h*W + w.
    #   first W cols -> mean over H (x_inp), next H cols -> mean over W (y_inp)
    pidx = np.arange(H * W)
    S_np = np.zeros((H * W, W + H), np.float32)
    S_np[pidx, pidx % W] = 1.0 / H
    S_np[pidx, W + pidx // W] = 1.0 / W
    S = jnp.asarray(S_np).astype(inp_nchw.dtype)       # matches input dtype

    # concat_conv: fold eval-mode BN into the 1x1 conv.
    cc_s = p['cc_gamma'] / jnp.sqrt(p['cc_var'] + eps)                # (W+H,)
    wccT = (p['wcc'] * cc_s[:, None]).T.astype(f32)                   # (W+H, W+H)
    bcc = (p['cc_beta'] - p['cc_mean'] * cc_s).reshape(1, W + H).astype(f32)

    # out_conv first BaseConv: fold BN; fold its hidden->1 1x1 into the x branch.
    o_s = p['o_gamma'] / jnp.sqrt(p['o_var'] + eps)                   # (1,)
    w1_eff = (p['w1'].reshape(-1) * o_s[0]).astype(f32)               # (HID,)
    o_shift = ((p['o_beta'] - p['o_mean'] * o_s)[0]).astype(f32)

    wx_eff = (p['wx'] * w1_eff[:, None]).astype(f32)                  # (HID, C)
    bx_eff = (p['bx'] * w1_eff).astype(f32)                           # (HID,)
    wy = p['wy'].astype(f32)                                          # (HID, C)
    by = p['by'].astype(f32)                                          # (HID,)

    # Bilinear fold: m = [xo;1]^T A_aug [yo;1]  (HID contracted away host-side,
    # o_shift folded into the constant corner).
    A = jnp.einsum('hc,hd->cd', wx_eff, wy, precision=hp)             # (C, C)
    u = jnp.einsum('hc,h->c', wx_eff, by, precision=hp)               # (C,)
    v = jnp.einsum('h,hd->d', bx_eff, wy, precision=hp)               # (C,)
    s0 = jnp.dot(bx_eff, by, precision=hp) + o_shift
    A_aug = jnp.zeros((C1, C1), f32)
    A_aug = A_aug.at[:C, :C].set(A)
    A_aug = A_aug.at[:C, C].set(u)
    A_aug = A_aug.at[C, :C].set(v)
    A_aug = A_aug.at[C, C].set(s0)

    # 3x3 conv (pad=1) as banded / shift matrices with edge handling baked in.
    w3 = p['w3'].astype(f32)                                          # [di+1, dj+1]

    def band(di):
        out = jnp.zeros((H, H), f32)
        for dj in (-1, 0, 1):
            out = out + w3[di + 1, dj + 1] * jnp.asarray(np.eye(H, k=-dj), f32)
        return out

    band_m1, band_0, band_p1 = band(-1), band(0), band(1)
    rsh_m1 = jnp.asarray(np.eye(W, k=-1), f32)
    rsh_p1 = jnp.asarray(np.eye(W, k=1), f32)
    b3s = jnp.reshape(jnp.asarray(p['b3'], f32), (1,))

    def bcast(a):        # pre-broadcast tiny constants to the chunk size once
        return jnp.broadcast_to(a, (CH,) + a.shape)

    aaug_b = bcast(A_aug)
    bm1_b, b0_b, bp1_b = bcast(band_m1), bcast(band_0), bcast(band_p1)
    rm1_b, rp1_b = bcast(rsh_m1), bcast(rsh_p1)

    # NCHW consumed directly; free metadata reshape to lane-dense (B*C, H*W).
    x2d = inp_nchw.reshape(B * C, H * W)

    # VMEM budget (padded layouts, double buffering, headroom), v7x-safe cap.
    in_block = Bt * C * H * W * itemsize
    out_block = Bt * _pad(W, 8) * _pad(H, 128) * 4
    const_bytes = (_pad(H * W, 8) * _pad(W + H, 128) * itemsize
                   + 2 * _pad(W + H, 8) * _pad(W + H, 128) * 4
                   + 6 * CH * _pad(H, 8) * 128 * 4)
    scratch_bytes = (_pad(Bt * C, 8) * _pad(W + H, 128)
                     + 2 * CH * _pad(W, 8) * 128) * 4
    est = 2 * (in_block + out_block) + 2 * const_bytes + scratch_bytes + (8 << 20)
    vmem_limit = int(min(48 << 20, max(16 << 20, est)))

    def const_spec(arr):
        nd = arr.ndim
        return pl.BlockSpec(arr.shape, lambda i, _nd=nd: (0,) * _nd)

    kernel = functools.partial(_calayer_kernel, Bt, C, W, H, CH)

    out3 = pl.pallas_call(
        kernel,
        out_shape=jax.ShapeDtypeStruct((B, W, H), f32),
        grid=(B // Bt,),
        in_specs=[
            pl.BlockSpec((Bt * C, H * W), lambda i: (i, 0)),      # feature map
            const_spec(S), const_spec(wccT), const_spec(bcc),
            const_spec(aaug_b),
            const_spec(bm1_b), const_spec(b0_b), const_spec(bp1_b),
            const_spec(rm1_b), const_spec(rp1_b),
            pl.BlockSpec(memory_space=pltpu.MemorySpace.SMEM),    # b3 scalar
        ],
        out_specs=pl.BlockSpec((Bt, W, H), lambda i: (i, 0, 0)),
        scratch_shapes=[
            pltpu.VMEM((Bt * C, W + H), f32),                     # [xo | yo]
            pltpu.VMEM((CH, W, C1), f32),                         # chunk xo^T
            pltpu.VMEM((CH, H, C1), f32),                         # chunk yo^T
        ],
        compiler_params=pltpu.CompilerParams(
            dimension_semantics=("parallel",),
            vmem_limit_bytes=vmem_limit),
    )(x2d, S, wccT, bcc, aaug_b, bm1_b, b0_b, bp1_b, rm1_b, rp1_b, b3s)

    # Free metadata reshape back to the module's (B, 1, W, H) output.
    return out3.reshape(B, 1, W, H)


# ----------------------------------------------------------------------------
# Pure-JAX reference (mirrors the PyTorch forward, NCHW) for validation.
# ----------------------------------------------------------------------------
def _silu(x):
    return x * jax.nn.sigmoid(x)


def _bn_eval(x, gamma, beta, mean, var, eps=1e-5):
    s = (1, -1, 1, 1)
    return (x - mean.reshape(s)) / jnp.sqrt(var.reshape(s) + eps) * gamma.reshape(s) + beta.reshape(s)


def _conv1x1(x, w, b=None):
    y = jnp.einsum('oi,bihw->bohw', w, x, precision=lax.Precision.HIGHEST)
    if b is not None:
        y = y + b.reshape(1, -1, 1, 1)
    return y


def calayer_ref(inp, p, *, width, height):
    x_inp = jnp.mean(inp, axis=2, keepdims=True)            # (B,C,1,W)
    y_inp = jnp.mean(inp, axis=3, keepdims=True)            # (B,C,H,1)
    x_inp = jnp.transpose(x_inp, (0, 3, 2, 1))              # (B,W,1,C)
    y_inp = jnp.transpose(y_inp, (0, 2, 3, 1))              # (B,H,1,C)
    xy = jnp.concatenate([x_inp, y_inp], axis=1)            # (B,W+H,1,C)
    z = _conv1x1(xy, p['wcc'])
    z = _silu(_bn_eval(z, p['cc_gamma'], p['cc_beta'], p['cc_mean'], p['cc_var']))
    x_out = z[:, :width] + x_inp
    y_out = z[:, width:] + x_inp
    x_out = jnp.transpose(x_out, (0, 3, 1, 2))              # (B,C,W,1)
    y_out = jnp.transpose(y_out, (0, 3, 2, 1))              # (B,C,1,H)
    x_out = _conv1x1(x_out, p['wx'], p['bx'])               # (B,HID,W,1)
    y_out = _conv1x1(y_out, p['wy'], p['by'])               # (B,HID,1,H)
    mask = x_out * y_out                                    # (B,HID,W,H)
    m = _conv1x1(mask, p['w1'])                             # (B,1,W,H)
    m = _silu(_bn_eval(m, p['o_gamma'], p['o_beta'], p['o_mean'], p['o_var']))
    m = lax.conv_general_dilated(m, p['w3'].reshape(1, 1, 3, 3), (1, 1), 'SAME',
                                 dimension_numbers=('NCHW', 'OIHW', 'NCHW'),
                                 precision=lax.Precision.HIGHEST) + p['b3']
    return jax.nn.sigmoid(m)


def init_params(key, in_channels, width, height, hidden):
    ks = jax.random.split(key, 15)
    n = lambda k, shape, s=0.1: s * jax.random.normal(k, shape, jnp.float32)
    ch = width + height
    return dict(
        wcc=n(ks[0], (ch, ch)),
        cc_gamma=1.0 + n(ks[1], (ch,)),
        cc_beta=n(ks[2], (ch,)),
        cc_mean=n(ks[3], (ch,)),
        cc_var=1.0 + 0.5 * jax.random.uniform(ks[4], (ch,), jnp.float32),
        wx=n(ks[5], (hidden, in_channels)),
        bx=n(ks[6], (hidden,)),
        wy=n(ks[7], (hidden, in_channels)),
        by=n(ks[8], (hidden,)),
        w1=n(ks[9], (1, hidden)),
        o_gamma=1.0 + n(ks[10], (1,)),
        o_beta=n(ks[11], (1,)),
        o_mean=n(ks[12], (1,)),
        o_var=1.0 + 0.5 * jax.random.uniform(ks[13], (1,), jnp.float32),
        w3=n(ks[14], (3, 3)),
        b3=jnp.float32(0.05),
    )


if __name__ == "__main__":
    B, C, H, W = 2, 4, 16, 16       # batch, in_channels, height, width
    SCALE = 2
    HID = int(SCALE * C)

    key = jax.random.PRNGKey(0)
    kx, kp = jax.random.split(key)
    inp = jax.random.normal(kx, (B, C, H, W), jnp.float32)
    params = init_params(kp, C, W, H, HID)

    # f32 path
    out = calayer_pallas(inp, params, width=W, height=H, in_channels=C, hidden=HID)
    out = jax.block_until_ready(out)
    ref = calayer_ref(inp, params, width=W, height=H)
    assert out.shape == (B, 1, W, H), out.shape
    np.testing.assert_allclose(np.asarray(out), np.asarray(ref), rtol=2e-3, atol=2e-3)

    # bf16 input path (halves the dominant HBM read on v5e); compared against
    # the reference evaluated on the same bf16-rounded input.
    inp_bf16 = inp.astype(jnp.bfloat16)
    out_bf = calayer_pallas(inp_bf16, params, width=W, height=H, in_channels=C, hidden=HID)
    out_bf = jax.block_until_ready(out_bf)
    ref_bf = calayer_ref(inp_bf16.astype(jnp.float32), params, width=W, height=H)
    np.testing.assert_allclose(np.asarray(out_bf), np.asarray(ref_bf), rtol=5e-3, atol=5e-3)

    print("KERNEL_OK")
</pallas_src>

<mosaic_0001>
module attributes {stable_mosaic.version = 11 : i64} {
  func.func @_calayer_kernel(%arg0: i32, %arg1: memref<8x256xf32, #tpu.memory_space<vmem>>, %arg2: memref<256x32xf32, #tpu.memory_space<vmem>>, %arg3: memref<32x32xf32, #tpu.memory_space<vmem>>, %arg4: memref<1x32xf32, #tpu.memory_space<vmem>>, %arg5: memref<2x5x5xf32, #tpu.memory_space<vmem>>, %arg6: memref<2x16x16xf32, #tpu.memory_space<vmem>>, %arg7: memref<2x16x16xf32, #tpu.memory_space<vmem>>, %arg8: memref<2x16x16xf32, #tpu.memory_space<vmem>>, %arg9: memref<2x16x16xf32, #tpu.memory_space<vmem>>, %arg10: memref<2x16x16xf32, #tpu.memory_space<vmem>>, %arg11: memref<1xf32, #tpu.memory_space<smem>>, %arg12: memref<2x16x16xf32, #tpu.memory_space<vmem>>, %arg13: memref<8x32xf32, #tpu.memory_space<vmem>>, %arg14: memref<2x16x5xf32, #tpu.memory_space<vmem>>, %arg15: memref<2x16x5xf32, #tpu.memory_space<vmem>>) attributes {dimension_semantics = [#tpu.dimension_semantics<parallel>], iteration_bounds = array<i64: 1>, scalar_prefetch = 0 : i64, scratch_operands = 3 : i64, tpu.core_type = #tpu.core_type<tc>, window_params = [{transform_indices = @transform_0, window_bounds = array<i64: 8, 256>}, {pipeline_mode = #tpu.pipeline_mode<synchronous>, transform_indices = @transform_1, window_bounds = array<i64: 256, 32>}, {pipeline_mode = #tpu.pipeline_mode<synchronous>, transform_indices = @transform_2, window_bounds = array<i64: 32, 32>}, {pipeline_mode = #tpu.pipeline_mode<synchronous>, transform_indices = @transform_3, window_bounds = array<i64: 1, 32>}, {pipeline_mode = #tpu.pipeline_mode<synchronous>, transform_indices = @transform_4, window_bounds = array<i64: 2, 5, 5>}, {pipeline_mode = #tpu.pipeline_mode<synchronous>, transform_indices = @transform_5, window_bounds = array<i64: 2, 16, 16>}, {pipeline_mode = #tpu.pipeline_mode<synchronous>, transform_indices = @transform_6, window_bounds = array<i64: 2, 16, 16>}, {pipeline_mode = #tpu.pipeline_mode<synchronous>, transform_indices = @transform_7, window_bounds = array<i64: 2, 16, 16>}, {pipeline_mode = #tpu.pipeline_mode<synchronous>, transform_indices = @transform_8, window_bounds = array<i64: 2, 16, 16>}, {pipeline_mode = #tpu.pipeline_mode<synchronous>, transform_indices = @transform_9, window_bounds = array<i64: 2, 16, 16>}, {transform_indices = @transform_10, window_bounds = array<i64: 1>}, {transform_indices = @transform_11, window_bounds = array<i64: 2, 16, 16>}]} {
    %c0 = arith.constant 0 : index
    %c0_0 = arith.constant 0 : index
    %0 = vector.load %arg1[%c0, %c0_0] : memref<8x256xf32, #tpu.memory_space<vmem>>, vector<8x256xf32>
    %c0_1 = arith.constant 0 : index
    %c0_2 = arith.constant 0 : index
    %1 = vector.load %arg2[%c0_1, %c0_2] : memref<256x32xf32, #tpu.memory_space<vmem>>, vector<256x32xf32>
    %cst = arith.constant dense<0.000000e+00> : vector<8x32xf32>
    %2 = tpu.matmul %0, %1, %cst {dimension_numbers = #tpu.dot_dimension_numbers<[1], [0], [0], [1], [0, 0, 1, 1], [], []>} : vector<8x256xf32>, vector<256x32xf32>, vector<8x32xf32> -> vector<8x32xf32>
    %c0_3 = arith.constant 0 : index
    %c0_4 = arith.constant 0 : index
    %3 = vector.load %arg3[%c0_3, %c0_4] : memref<32x32xf32, #tpu.memory_space<vmem>>, vector<32x32xf32>
    %cst_5 = arith.constant dense<0.000000e+00> : vector<8x32xf32>
    %4 = tpu.matmul %2, %3, %cst_5 {dimension_numbers = #tpu.dot_dimension_numbers<[1], [0], [0], [1], [0, 0, 1, 1], [], []>} : vector<8x32xf32>, vector<32x32xf32>, vector<8x32xf32> -> vector<8x32xf32>
    %c0_6 = arith.constant 0 : index
    %c0_7 = arith.constant 0 : index
    %5 = vector.load %arg4[%c0_6, %c0_7] : memref<1x32xf32, #tpu.memory_space<vmem>>, vector<1x32xf32>
    %6 = vector.broadcast %5 : vector<1x32xf32> to vector<8x32xf32>
    %7 = arith.addf %4, %6 : vector<8x32xf32>
    %8 = arith.negf %7 : vector<8x32xf32>
    %9 = math.exp %8 : vector<8x32xf32>
    %cst_8 = arith.constant 1.000000e+00 : f32
    %10 = vector.broadcast %cst_8 : f32 to vector<8x32xf32>
    %11 = arith.addf %10, %9 : vector<8x32xf32>
    %12 = arith.divf %10, %11 : vector<8x32xf32>
    %13 = arith.mulf %7, %12 : vector<8x32xf32>
    %14 = vector.extract_strided_slice %2 {offsets = [0, 0], sizes = [8, 16], strides = [1, 1]} : vector<8x32xf32> to vector<8x16xf32>
    %15 = vector.extract_strided_slice %13 {offsets = [0, 0], sizes = [8, 16], strides = [1, 1]} : vector<8x32xf32> to vector<8x16xf32>
    %16 = arith.addf %15, %14 : vector<8x16xf32>
    %c0_9 = arith.constant 0 : index
    %c0_10 = arith.constant 0 : index
    %17 = vector.load %arg13[%c0_9, %c0_10] : memref<8x32xf32, #tpu.memory_space<vmem>>, vector<8x16xf32>
    tpu.vector_store %arg13[%c0_9, %c0_10], %16 {strides = array<i32>} : memref<8x32xf32, #tpu.memory_space<vmem>>, vector<8x16xf32>,
    %18 = vector.extract_strided_slice %13 {offsets = [0, 16], sizes = [8, 16], strides = [1, 1]} : vector<8x32xf32> to vector<8x16xf32>
    %19 = arith.addf %18, %14 : vector<8x16xf32>
    %c0_11 = arith.constant 0 : index
    %c16 = arith.constant 16 : index
    %20 = vector.load %arg13[%c0_11, %c16] : memref<8x32xf32, #tpu.memory_space<vmem>>, vector<8x16xf32>
    tpu.vector_store %arg13[%c0_11, %c16], %19 {strides = array<i32>} : memref<8x32xf32, #tpu.memory_space<vmem>>, vector<8x16xf32>,
    %cst_12 = arith.constant 1.000000e+00 : f32
    %21 = vector.broadcast %cst_12 : f32 to vector<2x16x1xf32>
    %c0_13 = arith.constant 0 : index
    %c0_14 = arith.constant 0 : index
    %c4 = arith.constant 4 : index
    %22 = vector.load %arg14[%c0_13, %c0_14, %c4] : memref<2x16x5xf32, #tpu.memory_space<vmem>>, vector<2x16x1xf32>
    tpu.vector_store %arg14[%c0_13, %c0_14, %c4], %21 {strides = array<i32>} : memref<2x16x5xf32, #tpu.memory_space<vmem>>, vector<2x16x1xf32>,
    %cst_15 = arith.constant 1.000000e+00 : f32
    %23 = vector.broadcast %cst_15 : f32 to vector<2x16x1xf32>
    %c0_16 = arith.constant 0 : index
    %c0_17 = arith.constant 0 : index
    %c4_18 = arith.constant 4 : index
    %24 = vector.load %arg15[%c0_16, %c0_17, %c4_18] : memref<2x16x5xf32, #tpu.memory_space<vmem>>, vector<2x16x1xf32>
    tpu.vector_store %arg15[%c0_16, %c0_17, %c4_18], %23 {strides = array<i32>} : memref<2x16x5xf32, #tpu.memory_space<vmem>>, vector<2x16x1xf32>,
    %c0_19 = arith.constant 0 : index
    %c0_20 = arith.constant 0 : index
    %c0_21 = arith.constant 0 : index
    %25 = vector.load %arg5[%c0_19, %c0_20, %c0_21] : memref<2x5x5xf32, #tpu.memory_space<vmem>>, vector<2x5x5xf32>
    %c0_22 = arith.constant 0 : index
    %c0_23 = arith.constant 0 : index
    %c0_24 = arith.constant 0 : index
    %26 = vector.load %arg6[%c0_22, %c0_23, %c0_24] : memref<2x16x16xf32, #tpu.memory_space<vmem>>, vector<2x16x16xf32>
    %c0_25 = arith.constant 0 : index
    %c0_26 = arith.constant 0 : index
    %c0_27 = arith.constant 0 : index
    %27 = vector.load %arg7[%c0_25, %c0_26, %c0_27] : memref<2x16x16xf32, #tpu.memory_space<vmem>>, vector<2x16x16xf32>
    %c0_28 = arith.constant 0 : index
    %c0_29 = arith.constant 0 : index
    %c0_30 = arith.constant 0 : index
    %28 = vector.load %arg8[%c0_28, %c0_29, %c0_30] : memref<2x16x16xf32, #tpu.memory_space<vmem>>, vector<2x16x16xf32>
    %c0_31 = arith.constant 0 : index
    %c0_32 = arith.constant 0 : index
    %c0_33 = arith.constant 0 : index
    %29 = vector.load %arg9[%c0_31, %c0_32, %c0_33] : memref<2x16x16xf32, #tpu.memory_space<vmem>>, vector<2x16x16xf32>
    %c0_34 = arith.constant 0 : index
    %c0_35 = arith.constant 0 : index
    %c0_36 = arith.constant 0 : index
    %30 = vector.load %arg10[%c0_34, %c0_35, %c0_36] : memref<2x16x16xf32, #tpu.memory_space<vmem>>, vector<2x16x16xf32>
    %c0_37 = arith.constant 0 : index
    %31 = memref.load %arg11[%c0_37] : memref<1xf32, #tpu.memory_space<smem>>
    %c0_i32 = arith.constant 0 : i32
    %c1_i32 = arith.constant 1 : i32
    %32 = arith.muli %c0_i32, %c1_i32 : i32
    %c0_i32_38 = arith.constant 0 : i32
    %33 = arith.addi %c0_i32_38, %32 : i32
    %c2_i32 = arith.constant 2 : i32
    %34 = arith.muli %33, %c2_i32 : i32
    %c0_i32_39 = arith.constant 0 : i32
    %35 = arith.addi %34, %c0_i32_39 : i32
    %c4_i32 = arith.constant 4 : i32
    %36 = arith.muli %35, %c4_i32 : i32
    %37 = arith.index_cast %36 : i32 to index
    %c0_40 = arith.constant 0 : index
    %38 = vector.load %arg13[%37, %c0_40] : memref<8x32xf32, #tpu.memory_space<vmem>>, vector<4x32xf32>
    %39 = vector.extract_strided_slice %38 {offsets = [0, 0], sizes = [4, 16], strides = [1, 1]} : vector<4x32xf32> to vector<4x16xf32>
    %40 = tpu.transpose %39, [1, 0] : vector<4x16xf32> -> vector<16x4xf32>
    %c0_41 = arith.constant 0 : index
    %c0_42 = arith.constant 0 : index
    %c0_43 = arith.constant 0 : index
    %41 = vector.load %arg14[%c0_41, %c0_42, %c0_43] : memref<2x16x5xf32, #tpu.memory_space<vmem>>, vector<1x16x4xf32>
    %42 = vector.shape_cast %41 : vector<1x16x4xf32> to vector<16x4xf32>
    %43 = vector.shape_cast %40 : vector<16x4xf32> to vector<1x16x4xf32>
    tpu.vector_store %arg14[%c0_41, %c0_42, %c0_43], %43 {strides = array<i32>} : memref<2x16x5xf32, #tpu.memory_space<vmem>>, vector<1x16x4xf32>,
    %44 = vector.extract_strided_slice %38 {offsets = [0, 16], sizes = [4, 16], strides = [1, 1]} : vector<4x32xf32> to vector<4x16xf32>
    %45 = tpu.transpose %44, [1, 0] : vector<4x16xf32> -> vector<16x4xf32>
    %c0_44 = arith.constant 0 : index
    %c0_45 = arith.constant 0 : index
    %c0_46 = arith.constant 0 : index
    %46 = vector.load %arg15[%c0_44, %c0_45, %c0_46] : memref<2x16x5xf32, #tpu.memory_space<vmem>>, vector<1x16x4xf32>
    %47 = vector.shape_cast %46 : vector<1x16x4xf32> to vector<16x4xf32>
    %48 = vector.shape_cast %45 : vector<16x4xf32> to vector<1x16x4xf32>
    tpu.vector_store %arg15[%c0_44, %c0_45, %c0_46], %48 {strides = array<i32>} : memref<2x16x5xf32, #tpu.memory_space<vmem>>, vector<1x16x4xf32>,
    %c2_i32_47 = arith.constant 2 : i32
    %49 = arith.muli %33, %c2_i32_47 : i32
    %c1_i32_48 = arith.constant 1 : i32
    %50 = arith.addi %49, %c1_i32_48 : i32
    %c4_i32_49 = arith.constant 4 : i32
    %51 = arith.muli %50, %c4_i32_49 : i32
    %52 = arith.index_cast %51 : i32 to index
    %c0_50 = arith.constant 0 : index
    %53 = vector.load %arg13[%52, %c0_50] : memref<8x32xf32, #tpu.memory_space<vmem>>, vector<4x32xf32>
    %54 = vector.extract_strided_slice %53 {offsets = [0, 0], sizes = [4, 16], strides = [1, 1]} : vector<4x32xf32> to vector<4x16xf32>
    %55 = tpu.transpose %54, [1, 0] : vector<4x16xf32> -> vector<16x4xf32>
    %c1 = arith.constant 1 : index
    %c0_51 = arith.constant 0 : index
    %c0_52 = arith.constant 0 : index
    %56 = vector.load %arg14[%c1, %c0_51, %c0_52] : memref<2x16x5xf32, #tpu.memory_space<vmem>>, vector<1x16x4xf32>
    %57 = vector.shape_cast %56 : vector<1x16x4xf32> to vector<16x4xf32>
    %58 = vector.shape_cast %55 : vector<16x4xf32> to vector<1x16x4xf32>
    tpu.vector_store %arg14[%c1, %c0_51, %c0_52], %58 {strides = array<i32>} : memref<2x16x5xf32, #tpu.memory_space<vmem>>, vector<1x16x4xf32>,
    %59 = vector.extract_strided_slice %53 {offsets = [0, 16], sizes = [4, 16], strides = [1, 1]} : vector<4x32xf32> to vector<4x16xf32>
    %60 = tpu.transpose %59, [1, 0] : vector<4x16xf32> -> vector<16x4xf32>
    %c1_53 = arith.constant 1 : index
    %c0_54 = arith.constant 0 : index
    %c0_55 = arith.constant 0 : index
    %61 = vector.load %arg15[%c1_53, %c0_54, %c0_55] : memref<2x16x5xf32, #tpu.memory_space<vmem>>, vector<1x16x4xf32>
    %62 = vector.shape_cast %61 : vector<1x16x4xf32> to vector<16x4xf32>
    %63 = vector.shape_cast %60 : vector<16x4xf32> to vector<1x16x4xf32>
    tpu.vector_store %arg15[%c1_53, %c0_54, %c0_55], %63 {strides = array<i32>} : memref<2x16x5xf32, #tpu.memory_space<vmem>>, vector<1x16x4xf32>,
    %c0_56 = arith.constant 0 : index
    %c0_57 = arith.constant 0 : index
    %c0_58 = arith.constant 0 : index
    %64 = vector.load %arg14[%c0_56, %c0_57, %c0_58] : memref<2x16x5xf32, #tpu.memory_space<vmem>>, vector<2x16x5xf32>
    %c0_59 = arith.constant 0 : index
    %c0_60 = arith.constant 0 : index
    %c0_61 = arith.constant 0 : index
    %65 = vector.load %arg15[%c0_59, %c0_60, %c0_61] : memref<2x16x5xf32, #tpu.memory_space<vmem>>, vector<2x16x5xf32>
    "tpu.trace_start"() <{level = 10 : i32, message = "bwc,bcd->bwd"}> : () -> ()
    %cst_62 = arith.constant dense<0.000000e+00> : vector<2x16x5xf32>
    %66 = tpu.matmul %64, %25, %cst_62 {dimension_numbers = #tpu.dot_dimension_numbers<[2], [1], [1], [2], [0, 0, 0, 1, 1, 2], [0], [0]>} : vector<2x16x5xf32>, vector<2x5x5xf32>, vector<2x16x5xf32> -> vector<2x16x5xf32>
    "tpu.trace_stop"() : () -> ()
    "tpu.trace_start"() <{level = 10 : i32, message = "bwd,bhd->bwh"}> : () -> ()
    %cst_63 = arith.constant dense<0.000000e+00> : vector<2x16x16xf32>
    %67 = tpu.matmul %66, %65, %cst_63 {dimension_numbers = #tpu.dot_dimension_numbers<[2], [2], [1], [1], [0, 0, 0, 1, 1, 1], [0], [0]>} : vector<2x16x5xf32>, vector<2x16x5xf32>, vector<2x16x16xf32> -> vector<2x16x16xf32>
    "tpu.trace_stop"() : () -> ()
    %68 = arith.negf %67 : vector<2x16x16xf32>
    %69 = math.exp %68 : vector<2x16x16xf32>
    %cst_64 = arith.constant 1.000000e+00 : f32
    %70 = vector.broadcast %cst_64 : f32 to vector<2x16x16xf32>
    %71 = arith.addf %70, %69 : vector<2x16x16xf32>
    %72 = arith.divf %70, %71 : vector<2x16x16xf32>
    %73 = arith.mulf %67, %72 : vector<2x16x16xf32>
    "tpu.trace_start"() <{level = 10 : i32, message = "bwh,bhk->bwk"}> : () -> ()
    %cst_65 = arith.constant dense<0.000000e+00> : vector<2x16x16xf32>
    %74 = tpu.matmul %73, %26, %cst_65 {dimension_numbers = #tpu.dot_dimension_numbers<[2], [1], [1], [2], [0, 0, 0, 1, 1, 2], [0], [0]>} : vector<2x16x16xf32>, vector<2x16x16xf32>, vector<2x16x16xf32> -> vector<2x16x16xf32>
    %cst_66 = arith.constant dense<0.000000e+00> : vector<2x16x16xf32>
    %75 = tpu.matmul %73, %27, %cst_66 {dimension_numbers = #tpu.dot_dimension_numbers<[2], [1], [1], [2], [0, 0, 0, 1, 1, 2], [0], [0]>} : vector<2x16x16xf32>, vector<2x16x16xf32>, vector<2x16x16xf32> -> vector<2x16x16xf32>
    %cst_67 = arith.constant dense<0.000000e+00> : vector<2x16x16xf32>
    %76 = tpu.matmul %73, %28, %cst_67 {dimension_numbers = #tpu.dot_dimension_numbers<[2], [1], [1], [2], [0, 0, 0, 1, 1, 2], [0], [0]>} : vector<2x16x16xf32>, vector<2x16x16xf32>, vector<2x16x16xf32> -> vector<2x16x16xf32>
    "tpu.trace_stop"() : () -> ()
    "tpu.trace_start"() <{level = 10 : i32, message = "bvw,bwk->bvk"}> : () -> ()
    %cst_68 = arith.constant dense<0.000000e+00> : vector<2x16x16xf32>
    %77 = tpu.matmul %29, %74, %cst_68 {dimension_numbers = #tpu.dot_dimension_numbers<[2], [1], [1], [2], [0, 0, 0, 1, 1, 2], [0], [0]>} : vector<2x16x16xf32>, vector<2x16x16xf32>, vector<2x16x16xf32> -> vector<2x16x16xf32>
    "tpu.trace_stop"() : () -> ()
    %78 = arith.addf %77, %75 : vector<2x16x16xf32>
    "tpu.trace_start"() <{level = 10 : i32, message = "bvw,bwk->bvk"}> : () -> ()
    %cst_69 = arith.constant dense<0.000000e+00> : vector<2x16x16xf32>
    %79 = tpu.matmul %30, %76, %cst_69 {dimension_numbers = #tpu.dot_dimension_numbers<[2], [1], [1], [2], [0, 0, 0, 1, 1, 2], [0], [0]>} : vector<2x16x16xf32>, vector<2x16x16xf32>, vector<2x16x16xf32> -> vector<2x16x16xf32>
    "tpu.trace_stop"() : () -> ()
    %80 = arith.addf %78, %79 : vector<2x16x16xf32>
    %81 = vector.broadcast %31 : f32 to vector<2x16x16xf32>
    %82 = arith.addf %80, %81 : vector<2x16x16xf32>
    %83 = arith.negf %82 : vector<2x16x16xf32>
    %84 = math.exp %83 : vector<2x16x16xf32>
    %cst_70 = arith.constant 1.000000e+00 : f32
    %85 = vector.broadcast %cst_70 : f32 to vector<2x16x16xf32>
    %86 = arith.addf %85, %84 : vector<2x16x16xf32>
    %87 = arith.divf %85, %86 : vector<2x16x16xf32>
    %c2_i32_71 = arith.constant 2 : i32
    %88 = arith.muli %33, %c2_i32_71 : i32
    %89 = arith.index_cast %88 : i32 to index
    %c0_72 = arith.constant 0 : index
    %c0_73 = arith.constant 0 : index
    %90 = vector.load %arg12[%89, %c0_72, %c0_73] : memref<2x16x16xf32, #tpu.memory_space<vmem>>, vector<2x16x16xf32>
    tpu.vector_store %arg12[%89, %c0_72, %c0_73], %87 {strides = array<i32>} : memref<2x16x16xf32, #tpu.memory_space<vmem>>, vector<2x16x16xf32>,
    %c1_i32_74 = arith.constant 1 : i32
    return
  }
  func.func @transform_0(%arg0: i32) -> (i32, i32) {
    %c0_i32 = arith.constant 0 : i32
    %c0_i32_0 = arith.constant 0 : i32
    return %arg0, %c0_i32 : i32, i32
  }
  func.func @transform_1(%arg0: i32) -> (i32, i32) {
    %c0_i32 = arith.constant 0 : i32
    %c0_i32_0 = arith.constant 0 : i32
    %c0_i32_1 = arith.constant 0 : i32
    return %c0_i32, %c0_i32_0 : i32, i32
  }
  func.func @transform_2(%arg0: i32) -> (i32, i32) {
    %c0_i32 = arith.constant 0 : i32
    %c0_i32_0 = arith.constant 0 : i32
    %c0_i32_1 = arith.constant 0 : i32
    return %c0_i32, %c0_i32_0 : i32, i32
  }
  func.func @transform_3(%arg0: i32) -> (i32, i32) {
    %c0_i32 = arith.constant 0 : i32
    %c0_i32_0 = arith.constant 0 : i32
    %c0_i32_1 = arith.constant 0 : i32
    return %c0_i32, %c0_i32_0 : i32, i32
  }
  func.func @transform_4(%arg0: i32) -> (i32, i32, i32) {
    %c0_i32 = arith.constant 0 : i32
    %c0_i32_0 = arith.constant 0 : i32
    %c0_i32_1 = arith.constant 0 : i32
    %c0_i32_2 = arith.constant 0 : i32
    return %c0_i32, %c0_i32_0, %c0_i32_1 : i32, i32, i32
  }
  func.func @transform_5(%arg0: i32) -> (i32, i32, i32) {
    %c0_i32 = arith.constant 0 : i32
    %c0_i32_0 = arith.constant 0 : i32
    %c0_i32_1 = arith.constant 0 : i32
    %c0_i32_2 = arith.constant 0 : i32
    return %c0_i32, %c0_i32_0, %c0_i32_1 : i32, i32, i32
  }
  func.func @transform_6(%arg0: i32) -> (i32, i32, i32) {
    %c0_i32 = arith.constant 0 : i32
    %c0_i32_0 = arith.constant 0 : i32
    %c0_i32_1 = arith.constant 0 : i32
    %c0_i32_2 = arith.constant 0 : i32
    return %c0_i32, %c0_i32_0, %c0_i32_1 : i32, i32, i32
  }
  func.func @transform_7(%arg0: i32) -> (i32, i32, i32) {
    %c0_i32 = arith.constant 0 : i32
    %c0_i32_0 = arith.constant 0 : i32
    %c0_i32_1 = arith.constant 0 : i32
    %c0_i32_2 = arith.constant 0 : i32
    return %c0_i32, %c0_i32_0, %c0_i32_1 : i32, i32, i32
  }
  func.func @transform_8(%arg0: i32) -> (i32, i32, i32) {
    %c0_i32 = arith.constant 0 : i32
    %c0_i32_0 = arith.constant 0 : i32
    %c0_i32_1 = arith.constant 0 : i32
    %c0_i32_2 = arith.constant 0 : i32
    return %c0_i32, %c0_i32_0, %c0_i32_1 : i32, i32, i32
  }
  func.func @transform_9(%arg0: i32) -> (i32, i32, i32) {
    %c0_i32 = arith.constant 0 : i32
    %c0_i32_0 = arith.constant 0 : i32
    %c0_i32_1 = arith.constant 0 : i32
    %c0_i32_2 = arith.constant 0 : i32
    return %c0_i32, %c0_i32_0, %c0_i32_1 : i32, i32, i32
  }
  func.func @transform_10(%arg0: i32) -> i32 {
    %c0_i32 = arith.constant 0 : i32
    %c0_i32_0 = arith.constant 0 : i32
    return %c0_i32 : i32
  }
  func.func @transform_11(%arg0: i32) -> (i32, i32, i32) {
    %c0_i32 = arith.constant 0 : i32
    %c0_i32_0 = arith.constant 0 : i32
    %c0_i32_1 = arith.constant 0 : i32
    return %arg0, %c0_i32, %c0_i32_0 : i32, i32, i32
  }
}

</mosaic_0001>

<llo_original>
// kernel: tpu_custom_call.1
$region0: #{tpu_custom_call.1}
  #allocation0 [shape = 'u32[]', space=smem, size = 0x4, offset = 0x4, fixed_abs, tag = 'smem constant byte address 0x4 - core index']
  #allocation1 [shape = 'u32[144,128]{1,0:T(1,128)}', space=vmem, size = 0x12000, scoped, tag = 'internal scratch']
  #allocation2 [shape = 'f32[8,32]{1,0:T(8,128)}', space=vmem, size = 0x1000, scoped, tag = 'scratch operand']
  #allocation3 [shape = 'f32[2,16,5]{2,1,0:T(8,128)}', space=vmem, size = 0x4000, scoped, tag = 'scratch operand']
  #allocation4 [shape = 'f32[2,16,5]{2,1,0:T(8,128)}', space=vmem, size = 0x4000, scoped, tag = 'scratch operand']
  #allocation5 [shape = 'f32[1]{0:T(128)S(6)}', space=smem, size = 0x200, scoped, tag = 'scoped memory for tpu_custom_call.1']
  %s0 = inlined_call_operand.vmem [shape: f32[8,256], index: 0, kind: input, shape index: {}]
  %s1 = inlined_call_operand.vmem [shape: f32[256,32], index: 1, kind: input, shape index: {}]
  %s2 = inlined_call_operand.vmem [shape: f32[32,32], index: 2, kind: input, shape index: {}]
  %s3 = inlined_call_operand.vmem [shape: f32[1,32], index: 3, kind: input, shape index: {}]
  %s4 = inlined_call_operand.vmem [shape: f32[2,5,5], index: 4, kind: input, shape index: {}]
  %s5 = inlined_call_operand.vmem [shape: f32[2,16,16], index: 5, kind: input, shape index: {}]
  %s6 = inlined_call_operand.vmem [shape: f32[2,16,16], index: 6, kind: input, shape index: {}]
  %s7 = inlined_call_operand.vmem [shape: f32[2,16,16], index: 7, kind: input, shape index: {}]
  %s8 = inlined_call_operand.vmem [shape: f32[2,16,16], index: 8, kind: input, shape index: {}]
  %s9 = inlined_call_operand.vmem [shape: f32[2,16,16], index: 9, kind: input, shape index: {}]
  %s10 = inlined_call_operand.<no memory space> [shape: f32[1], index: 10, kind: input, shape index: {}]
  %s11 = inlined_call_operand.hbm [shape: f32[2,16,16], index: 11, kind: output, shape index: {}]
  %s12 = sld [smem:[#allocation0]]
  $region54: #{tpu_custom_call.1} parent=0
    _
  %s14 = ssub.s32 1, %s12
  %s15 = scalar_select 0, %s14, %s12
  %16 = sst [smem:[#allocation5]] %s10
  $region1: #{tpu_custom_call.1} parent=0
    #allocation6 [shape = 'u8[16384]{0}', space=vmem, size = 0x4000, scoped, tag = 'output window, operand 0, single buffered']
    #allocation7 [shape = 's32[1]{0}', space=sflag, size = 0x4, scoped, tag = 'scoped memory for tpu_custom_call.1']
    %17 = vsyncpa [#allocation7], 0
    // Predicated region
    $region2: #{tpu_custom_call.1} parent=1 // pred_check
      _
    $region3: #{tpu_custom_call.1} parent=1 // pred_check_branch
      %19 = sbr.rel (0) target = $region5
    $region4: #{tpu_custom_call.1} parent=1 // pred_region
      _
    $region5: #{tpu_custom_call.1} parent=1 // pred_fallthru
      _
    // Predicated region
    $region6: #{tpu_custom_call.1} parent=1 // pred_check
      _
    $region7: #{tpu_custom_call.1} parent=1 // pred_check_branch
      %21 = sbr.rel (0) target = $region9
    $region8: #{tpu_custom_call.1} parent=1 // pred_region
      _
    $region9: #{tpu_custom_call.1} parent=1 // pred_fallthru
      _
    // Predicated region
    $region10: #{tpu_custom_call.1} parent=1 // pred_check
      _
    $region11: #{tpu_custom_call.1} parent=1 // pred_check_branch
      %23 = sbr.rel (0) target = $region13
    $region12: #{tpu_custom_call.1} parent=1 // pred_region
      _
    $region13: #{tpu_custom_call.1} parent=1 // pred_fallthru
      _
    // Predicated region
    $region14: #{tpu_custom_call.1} parent=1 // pred_check
      _
    $region15: #{tpu_custom_call.1} parent=1 // pred_check_branch
      %25 = sbr.rel (0) target = $region17
    $region16: #{tpu_custom_call.1} parent=1 // pred_region
      _
    $region17: #{tpu_custom_call.1} parent=1 // pred_fallthru
      _
    // Predicated region
    $region18: #{tpu_custom_call.1} parent=1 // pred_check
      _
    $region19: #{tpu_custom_call.1} parent=1 // pred_check_branch
      %27 = sbr.rel (0) target = $region21
    $region20: #{tpu_custom_call.1} parent=1 // pred_region
      _
    $region21: #{tpu_custom_call.1} parent=1 // pred_fallthru
      _
    // Predicated region
    $region22: #{tpu_custom_call.1} parent=1 // pred_check
      _
    $region23: #{tpu_custom_call.1} parent=1 // pred_check_branch
      %29 = sbr.rel (0) target = $region25
    $region24: #{tpu_custom_call.1} parent=1 // pred_region
      _
    $region25: #{tpu_custom_call.1} parent=1 // pred_fallthru
      _
    // Predicated region
    $region26: #{tpu_custom_call.1} parent=1 // pred_check
      _
    $region27: #{tpu_custom_call.1} parent=1 // pred_check_branch
      %31 = sbr.rel (0) target = $region29
    $region28: #{tpu_custom_call.1} parent=1 // pred_region
      _
    $region29: #{tpu_custom_call.1} parent=1 // pred_fallthru
      _
    // Predicated region
    $region30: #{tpu_custom_call.1} parent=1 // pred_check
      _
    $region31: #{tpu_custom_call.1} parent=1 // pred_check_branch
      %33 = sbr.rel (0) target = $region33
    $region32: #{tpu_custom_call.1} parent=1 // pred_region
      _
    $region33: #{tpu_custom_call.1} parent=1 // pred_fallthru
      _
    // Predicated region
    $region34: #{tpu_custom_call.1} parent=1 // pred_check
      _
    $region35: #{tpu_custom_call.1} parent=1 // pred_check_branch
      %35 = sbr.rel (0) target = $region37
    $region36: #{tpu_custom_call.1} parent=1 // pred_region
      _
    $region37: #{tpu_custom_call.1} parent=1 // pred_fallthru
      _
    // Predicated region
    $region38: #{tpu_custom_call.1} parent=1 // pred_check
      _
    $region39: #{tpu_custom_call.1} parent=1 // pred_check_branch
      %37 = sbr.rel (0) target = $region41
    $region40: #{tpu_custom_call.1} parent=1 // pred_region
      _
    $region41: #{tpu_custom_call.1} parent=1 // pred_fallthru
      _
    // Predicated region
    $region42: #{tpu_custom_call.1} parent=1 // pred_check
      _
    $region43: #{tpu_custom_call.1} parent=1 // pred_check_branch
      %39 = sbr.rel (0) target = $region45
    $region44: #{tpu_custom_call.1} parent=1 // pred_region
      _
    $region45: #{tpu_custom_call.1} parent=1 // pred_fallthru
      _
    %v40 = vld [vmem:[%s0] sm:$0xff]
    %v41 = vld [vmem:[%s0 + $0x8] sm:$0xff]
    %v42 = vld [vmem:[%s1] sm:$0xff]
    %v43 = vld [vmem:[%s1 + $0x8] sm:$0xff]
    %v44 = vld [vmem:[%s1 + $0x10] sm:$0xff]
    %v45 = vld [vmem:[%s1 + $0x18] sm:$0xff]
    %v46 = vld [vmem:[%s1 + $0x20] sm:$0xff]
    %v47 = vld [vmem:[%s1 + $0x28] sm:$0xff]
    %v48 = vld [vmem:[%s1 + $0x30] sm:$0xff]
    %v49 = vld [vmem:[%s1 + $0x38] sm:$0xff]
    %v50 = vld [vmem:[%s1 + $0x40] sm:$0xff]
    %v51 = vld [vmem:[%s1 + $0x48] sm:$0xff]
    %v52 = vld [vmem:[%s1 + $0x50] sm:$0xff]
    %v53 = vld [vmem:[%s1 + $0x58] sm:$0xff]
    %v54 = vld [vmem:[%s1 + $0x60] sm:$0xff]
    %v55 = vld [vmem:[%s1 + $0x68] sm:$0xff]
    %v56 = vld [vmem:[%s1 + $0x70] sm:$0xff]
    %v57 = vld [vmem:[%s1 + $0x78] sm:$0xff]
    %v58 = vld [vmem:[%s1 + $0x80] sm:$0xff]
    %v59 = vld [vmem:[%s1 + $0x88] sm:$0xff]
    %v60 = vld [vmem:[%s1 + $0x90] sm:$0xff]
    %v61 = vld [vmem:[%s1 + $0x98] sm:$0xff]
    %v62 = vld [vmem:[%s1 + $0xa0] sm:$0xff]
    %v63 = vld [vmem:[%s1 + $0xa8] sm:$0xff]
    %v64 = vld [vmem:[%s1 + $0xb0] sm:$0xff]
    %v65 = vld [vmem:[%s1 + $0xb8] sm:$0xff]
    %v66 = vld [vmem:[%s1 + $0xc0] sm:$0xff]
    %v67 = vld [vmem:[%s1 + $0xc8] sm:$0xff]
    %v68 = vld [vmem:[%s1 + $0xd0] sm:$0xff]
    %v69 = vld [vmem:[%s1 + $0xd8] sm:$0xff]
    %v70 = vld [vmem:[%s1 + $0xe0] sm:$0xff]
    %v71 = vld [vmem:[%s1 + $0xe8] sm:$0xff]
    %v72 = vld [vmem:[%s1 + $0xf0] sm:$0xff]
    %v73 = vld [vmem:[%s1 + $0xf8] sm:$0xff]
    %74 = vmatprep.subr.mxu0 0.0
    %75 = vmatpush1.msra.mxu0 %v57
    %76 = vmatprep.subr.mxu0 0.0
    %77 = vmatpush1.msra.mxu0 %v56
    %78 = vmatprep.subr.mxu0 0.0
    %79 = vmatpush1.msra.mxu0 %v55
    %80 = vmatprep.subr.mxu0 0.0
    %81 = vmatpush1.msra.mxu0 %v54
    %82 = vmatprep.subr.mxu0 0.0
    %83 = vmatpush1.msra.mxu0 %v53
    %84 = vmatprep.subr.mxu0 0.0
    %85 = vmatpush1.msra.mxu0 %v52
    %86 = vmatprep.subr.mxu0 0.0
    %87 = vmatpush1.msra.mxu0 %v51
    %88 = vmatprep.subr.mxu0 0.0
    %89 = vmatpush1.msra.mxu0 %v50
    %90 = vmatprep.subr.mxu0 0.0
    %91 = vmatpush1.msra.mxu0 %v49
    %92 = vmatprep.subr.mxu0 0.0
    %93 = vmatpush1.msra.mxu0 %v48
    %94 = vmatprep.subr.mxu0 0.0
    %95 = vmatpush1.msra.mxu0 %v47
    %96 = vmatprep.subr.mxu0 0.0
    %97 = vmatpush1.msra.mxu0 %v46
    %98 = vmatprep.subr.mxu0 0.0
    %99 = vmatpush1.msra.mxu0 %v45
    %100 = vmatprep.subr.mxu0 0.0
    %101 = vmatpush1.msra.mxu0 %v44
    %102 = vmatprep.subr.mxu0 0.0
    %103 = vmatpush1.msra.mxu0 %v43
    %104 = vmatprep.subr.mxu0 0.0
    %105 = vmatpush1.msra.mxu0 %v42
    %106 = vmatprep.subr.mxu0 0.0
    %107 = vmatpush2.msra.mxu0 %v73
    %108 = vmatprep.subr.mxu0 0.0
    %109 = vmatpush2.msra.mxu0 %v72
    %110 = vmatprep.subr.mxu0 0.0
    %111 = vmatpush2.msra.mxu0 %v71
    %112 = vmatprep.subr.mxu0 0.0
    %113 = vmatpush2.msra.mxu0 %v70
    %114 = vmatprep.subr.mxu0 0.0
    %115 = vmatpush2.msra.mxu0 %v69
    %116 = vmatprep.subr.mxu0 0.0
    %117 = vmatpush2.msra.mxu0 %v68
    %118 = vmatprep.subr.mxu0 0.0
    %119 = vmatpush2.msra.mxu0 %v67
    %120 = vmatprep.subr.mxu0 0.0
    %121 = vmatpush2.msra.mxu0 %v66
    %122 = vmatprep.subr.mxu0 0.0
    %123 = vmatpush2.msra.mxu0 %v65
    %124 = vmatprep.subr.mxu0 0.0
    %125 = vmatpush2.msra.mxu0 %v64
    %126 = vmatprep.subr.mxu0 0.0
    %127 = vmatpush2.msra.mxu0 %v63
    %128 = vmatprep.subr.mxu0 0.0
    %129 = vmatpush2.msra.mxu0 %v62
    %130 = vmatprep.subr.mxu0 0.0
    %131 = vmatpush2.msra.mxu0 %v61
    %132 = vmatprep.subr.mxu0 0.0
    %133 = vmatpush2.msra.mxu0 %v60
    %134 = vmatprep.subr.mxu0 0.0
    %135 = vmatpush2.msra.mxu0 %v59
    %136 = vmatprep.subr.mxu0 0.0
    %137 = vmatpush2.msra.mxu0 %v58
    %138 = vmatprep.mubr.f32.mxu0 %v41
    %139 = vmatmul.mubr.f32.gmra.mxu0 %v40
    %v140 = vpop.f32.mrf.mxu0
    %v141 = vadd.f32 0.0, %v140
    %v142 = vpop.f32.mrf.mxu0
    %143 = vdwg.mxu0
    %v144 = vld [vmem:[%s2] sm:$0xff]
    %v145 = vld [vmem:[%s2 + $0x8] sm:$0xff]
    %v146 = vld [vmem:[%s2 + $0x10] sm:$0xff]
    %v147 = vld [vmem:[%s2 + $0x18] sm:$0xff]
    %v148 = vld [vmem:[%s3] sm:$0x1]
    %v150 = vlaneseq
    %v151 = vshrl.u32 %v150, 7
    %v152 = vsub.s32 0, %v151
    %v153 = vrot.slane %v148, %v152
    %vm155 = vcmask 261120
    %v157 = vsel %vm155, %v141, 0
    %159 = vmatprep.subr.mxu0 0.0
    %160 = vmatpush1.msra.mxu0 0.0
    %161 = vmatprep.subr.mxu0 0.0
    %162 = vmatpush1.msra.mxu0 0.0
    %163 = vmatprep.subr.mxu0 0.0
    %164 = vmatpush1.msra.mxu0 0.0
    %165 = vmatprep.subr.mxu0 0.0
    %166 = vmatpush1.msra.mxu0 0.0
    %167 = vmatprep.subr.mxu0 0.0
    %168 = vmatpush1.msra.mxu0 0.0
    %169 = vmatprep.subr.mxu0 0.0
    %170 = vmatpush1.msra.mxu0 0.0
    %171 = vmatprep.subr.mxu0 0.0
    %172 = vmatpush1.msra.mxu0 0.0
    %173 = vmatprep.subr.mxu0 0.0
    %174 = vmatpush1.msra.mxu0 0.0
    %175 = vmatprep.subr.mxu0 0.0
    %176 = vmatpush1.msra.mxu0 0.0
    %177 = vmatprep.subr.mxu0 0.0
    %178 = vmatpush1.msra.mxu0 0.0
    %179 = vmatprep.subr.mxu0 0.0
    %180 = vmatpush1.msra.mxu0 0.0
    %181 = vmatprep.subr.mxu0 0.0
    %182 = vmatpush1.msra.mxu0 0.0
    %183 = vmatprep.subr.mxu0 0.0
    %184 = vmatpush1.msra.mxu0 %v147
    %185 = vmatprep.subr.mxu0 0.0
    %186 = vmatpush1.msra.mxu0 %v146
    %187 = vmatprep.subr.mxu0 0.0
    %188 = vmatpush1.msra.mxu0 %v145
    %189 = vmatprep.subr.mxu0 0.0
    %190 = vmatpush1.msra.mxu0 %v144
    %191 = vmatprep.subr.mxu0 0.0
    %192 = vmatpush2.msra.mxu0 0.0
    %193 = vmatprep.subr.mxu0 0.0
    %194 = vmatpush2.msra.mxu0 0.0
    %195 = vmatprep.subr.mxu0 0.0
    %196 = vmatpush2.msra.mxu0 0.0
    %197 = vmatprep.subr.mxu0 0.0
    %198 = vmatpush2.msra.mxu0 0.0
    %199 = vmatprep.subr.mxu0 0.0
    %200 = vmatpush2.msra.mxu0 0.0
    %201 = vmatprep.subr.mxu0 0.0
    %202 = vmatpush2.msra.mxu0 0.0
    %203 = vmatprep.subr.mxu0 0.0
    %204 = vmatpush2.msra.mxu0 0.0
    %205 = vmatprep.subr.mxu0 0.0
    %206 = vmatpush2.msra.mxu0 0.0
    %207 = vmatprep.subr.mxu0 0.0
    %208 = vmatpush2.msra.mxu0 0.0
    %209 = vmatprep.subr.mxu0 0.0
    %210 = vmatpush2.msra.mxu0 0.0
    %211 = vmatprep.subr.mxu0 0.0
    %212 = vmatpush2.msra.mxu0 0.0
    %213 = vmatprep.subr.mxu0 0.0
    %214 = vmatpush2.msra.mxu0 0.0
    %215 = vmatprep.subr.mxu0 0.0
    %216 = vmatpush2.msra.mxu0 0.0
    %217 = vmatprep.subr.mxu0 0.0
    %218 = vmatpush2.msra.mxu0 0.0
    %219 = vmatprep.subr.mxu0 0.0
    %220 = vmatpush2.msra.mxu0 0.0
    %221 = vmatprep.subr.mxu0 0.0
    %222 = vmatpush2.msra.mxu0 0.0
    %223 = vmatprep.mubr.f32.mxu0 0.0
    %224 = vmatmul.mubr.f32.gmra.mxu0 %v157
    %v225 = vpop.f32.mrf.mxu0
    %v226 = vadd.f32 %v153, %v225
    %v227 = vpop.f32.mrf.mxu0
    %228 = vdwg.mxu0
    %v229 = vxor.u32 %v226, 2147483648
    %v230 = vmul.f32 %v229, 1.442695
    %v231 = vpow.pop %v230
    %v232 = vadd.f32 %v231, 1.0
    %v233 = vrcp.pop %v232
    %v234 = vmul.f32 1.0, %v233
    %v235 = vmul.f32 %v226, %v234
    %v236 = vadd.f32 %v235, %v141
    %vm237 = vcmask 130048
    %238 = vst.msk [vmem:[#allocation2] sm:$0xff] %vm237, %v236
    %239 = vrot.lane.b32.xlu0 %v141, 16
    %v240 = vpop.permute.xlu0 %239
    %v242 = vadd.f32 %v235, %v240
    %vm243 = vcmask 261248
    %244 = vst.msk [vmem:[#allocation2] sm:$0xff] %vm243, %v242
    %vm245 = vcmask 39968
    %246 = vst.msk [vmem:[#allocation3] sm:$0xff] %vm245, 1.0
    %247 = vst.msk [vmem:[#allocation3 + $0x8] sm:$0xff] %vm245, 1.0
    %248 = vst.msk [vmem:[#allocation3 + $0x10] sm:$0xff] %vm245, 1.0
    %249 = vst.msk [vmem:[#allocation3 + $0x18] sm:$0xff] %vm245, 1.0
    %250 = vst.msk [vmem:[#allocation4] sm:$0xff] %vm245, 1.0
    %251 = vst.msk [vmem:[#allocation4 + $0x8] sm:$0xff] %vm245, 1.0
    %252 = vst.msk [vmem:[#allocation4 + $0x10] sm:$0xff] %vm245, 1.0
    %253 = vst.msk [vmem:[#allocation4 + $0x18] sm:$0xff] %vm245, 1.0
    %v254 = vld [vmem:[%s4] sm:$0x1f]
    %v255 = vld [vmem:[%s4 + $0x8] sm:$0x1f]
    %v256 = vld [vmem:[%s5] sm:$0xff]
    %v257 = vld [vmem:[%s5 + $0x8] sm:$0xff]
    %v258 = vld [vmem:[%s5 + $0x10] sm:$0xff]
    %v259 = vld [vmem:[%s5 + $0x18] sm:$0xff]
    %v260 = vld [vmem:[%s6] sm:$0xff]
    %v261 = vld [vmem:[%s6 + $0x8] sm:$0xff]
    %v262 = vld [vmem:[%s6 + $0x10] sm:$0xff]
    %v263 = vld [vmem:[%s6 + $0x18] sm:$0xff]
    %v264 = vld [vmem:[%s7] sm:$0xff]
    %v265 = vld [vmem:[%s7 + $0x8] sm:$0xff]
    %v266 = vld [vmem:[%s7 + $0x10] sm:$0xff]
    %v267 = vld [vmem:[%s7 + $0x18] sm:$0xff]
    %v268 = vld [vmem:[%s8] sm:$0xff]
    %v269 = vld [vmem:[%s8 + $0x8] sm:$0xff]
    %v270 = vld [vmem:[%s8 + $0x10] sm:$0xff]
    %v271 = vld [vmem:[%s8 + $0x18] sm:$0xff]
    %v272 = vld [vmem:[%s9] sm:$0xff]
    %v273 = vld [vmem:[%s9 + $0x8] sm:$0xff]
    %v274 = vld [vmem:[%s9 + $0x10] sm:$0xff]
    %v275 = vld [vmem:[%s9 + $0x18] sm:$0xff]
    %s276 = sld [smem:[#allocation5]]
    %v277 = vld [vmem:[#allocation2] sm:$0xf]
    %278 = vxpose.xlu0.b32.start [1/16] %v277, 128
    %279 = vxpose.xlu0.b32.cont [2/16] 0.0, 128
    %280 = vxpose.xlu0.b32.cont [3/16] 0.0, 128
    %281 = vxpose.xlu0.b32.cont [4/16] 0.0, 128
    %282 = vxpose.xlu0.b32.cont [5/16] 0.0, 128
    %283 = vxpose.xlu0.b32.cont [6/16] 0.0, 128
    %284 = vxpose.xlu0.b32.cont [7/16] 0.0, 128
    %285 = vxpose.xlu0.b32.cont [8/16] 0.0, 128
    %286 = vxpose.xlu0.b32.cont [9/16] 0.0, 128
    %287 = vxpose.xlu0.b32.cont [10/16] 0.0, 128
    %288 = vxpose.xlu0.b32.cont [11/16] 0.0, 128
    %289 = vxpose.xlu0.b32.cont [12/16] 0.0, 128
    %290 = vxpose.xlu0.b32.cont [13/16] 0.0, 128
    %291 = vxpose.xlu0.b32.cont [14/16] 0.0, 128
    %292 = vxpose.xlu0.b32.cont [15/16] 0.0, 128
    %293 = vxpose.xlu0.b32.end [16/16] 0.0, 128
    %v294 = vpop.trf.xlu0
    %v295 = vpop.trf.xlu0
    %v296 = vpop.trf.xlu0
    %v297 = vpop.trf.xlu0
    %v298 = vpop.trf.xlu0
    %v299 = vpop.trf.xlu0
    %v300 = vpop.trf.xlu0
    %v301 = vpop.trf.xlu0
    %v302 = vpop.trf.xlu0
    %v303 = vpop.trf.xlu0
    %v304 = vpop.trf.xlu0
    %v305 = vpop.trf.xlu0
    %v306 = vpop.trf.xlu0
    %v307 = vpop.trf.xlu0
    %v308 = vpop.trf.xlu0
    %v309 = vpop.trf.xlu0
    %vm310 = vcmask 31744
    %311 = vst.msk [vmem:[#allocation3] sm:$0xff] %vm310, %v294
    %312 = vst.msk [vmem:[#allocation3 + $0x8] sm:$0xff] %vm310, %v295
    %314 = vrot.lane.b32.xlu0 %v277, 112
    %v315 = vpop.permute.xlu0 %314
    %317 = vxpose.xlu0.b32.start [1/16] %v315, 128
    %318 = vxpose.xlu0.b32.cont [2/16] 0.0, 128
    %319 = vxpose.xlu0.b32.cont [3/16] 0.0, 128
    %320 = vxpose.xlu0.b32.cont [4/16] 0.0, 128
    %321 = vxpose.xlu0.b32.cont [5/16] 0.0, 128
    %322 = vxpose.xlu0.b32.cont [6/16] 0.0, 128
    %323 = vxpose.xlu0.b32.cont [7/16] 0.0, 128
    %324 = vxpose.xlu0.b32.cont [8/16] 0.0, 128
    %325 = vxpose.xlu0.b32.cont [9/16] 0.0, 128
    %326 = vxpose.xlu0.b32.cont [10/16] 0.0, 128
    %327 = vxpose.xlu0.b32.cont [11/16] 0.0, 128
    %328 = vxpose.xlu0.b32.cont [12/16] 0.0, 128
    %329 = vxpose.xlu0.b32.cont [13/16] 0.0, 128
    %330 = vxpose.xlu0.b32.cont [14/16] 0.0, 128
    %331 = vxpose.xlu0.b32.cont [15/16] 0.0, 128
    %332 = vxpose.xlu0.b32.end [16/16] 0.0, 128
    %v333 = vpop.trf.xlu0
    %v334 = vpop.trf.xlu0
    %v335 = vpop.trf.xlu0
    %v336 = vpop.trf.xlu0
    %v337 = vpop.trf.xlu0
    %v338 = vpop.trf.xlu0
    %v339 = vpop.trf.xlu0
    %v340 = vpop.trf.xlu0
    %v341 = vpop.trf.xlu0
    %v342 = vpop.trf.xlu0
    %v343 = vpop.trf.xlu0
    %v344 = vpop.trf.xlu0
    %v345 = vpop.trf.xlu0
    %v346 = vpop.trf.xlu0
    %v347 = vpop.trf.xlu0
    %v348 = vpop.trf.xlu0
    %349 = vst.msk [vmem:[#allocation4] sm:$0xff] %vm310, %v333
    %350 = vst.msk [vmem:[#allocation4 + $0x8] sm:$0xff] %vm310, %v334
    %v351 = vld [vmem:[#allocation2 + $0x4] sm:$0xf]
    %352 = vxpose.xlu0.b32.start [1/16] %v351, 128
    %353 = vxpose.xlu0.b32.cont [2/16] 0.0, 128
    %354 = vxpose.xlu0.b32.cont [3/16] 0.0, 128
    %355 = vxpose.xlu0.b32.cont [4/16] 0.0, 128
    %356 = vxpose.xlu0.b32.cont [5/16] 0.0, 128
    %357 = vxpose.xlu0.b32.cont [6/16] 0.0, 128
    %358 = vxpose.xlu0.b32.cont [7/16] 0.0, 128
    %359 = vxpose.xlu0.b32.cont [8/16] 0.0, 128
    %360 = vxpose.xlu0.b32.cont [9/16] 0.0, 128
    %361 = vxpose.xlu0.b32.cont [10/16] 0.0, 128
    %362 = vxpose.xlu0.b32.cont [11/16] 0.0, 128
    %363 = vxpose.xlu0.b32.cont [12/16] 0.0, 128
    %364 = vxpose.xlu0.b32.cont [13/16] 0.0, 128
    %365 = vxpose.xlu0.b32.cont [14/16] 0.0, 128
    %366 = vxpose.xlu0.b32.cont [15/16] 0.0, 128
    %367 = vxpose.xlu0.b32.end [16/16] 0.0, 128
    %v368 = vpop.trf.xlu0
    %v369 = vpop.trf.xlu0
    %v370 = vpop.trf.xlu0
    %v371 = vpop.trf.xlu0
    %v372 = vpop.trf.xlu0
    %v373 = vpop.trf.xlu0
    %v374 = vpop.trf.xlu0
    %v375 = vpop.trf.xlu0
    %v376 = vpop.trf.xlu0
    %v377 = vpop.trf.xlu0
    %v378 = vpop.trf.xlu0
    %v379 = vpop.trf.xlu0
    %v380 = vpop.trf.xlu0
    %v381 = vpop.trf.xlu0
    %v382 = vpop.trf.xlu0
    %v383 = vpop.trf.xlu0
    %s384 = scalar_lea.vmem [#allocation3], 16
    %385 = vst.msk [vmem:[%s384] sm:$0xff] %vm310, %v368
    %386 = vst.msk [vmem:[%s384 + $0x8] sm:$0xff] %vm310, %v369
    %388 = vrot.lane.b32.xlu0 %v351, 112
    %v389 = vpop.permute.xlu0 %388
    %391 = vxpose.xlu0.b32.start [1/16] %v389, 128
    %392 = vxpose.xlu0.b32.cont [2/16] 0.0, 128
    %393 = vxpose.xlu0.b32.cont [3/16] 0.0, 128
    %394 = vxpose.xlu0.b32.cont [4/16] 0.0, 128
    %395 = vxpose.xlu0.b32.cont [5/16] 0.0, 128
    %396 = vxpose.xlu0.b32.cont [6/16] 0.0, 128
    %397 = vxpose.xlu0.b32.cont [7/16] 0.0, 128
    %398 = vxpose.xlu0.b32.cont [8/16] 0.0, 128
    %399 = vxpose.xlu0.b32.cont [9/16] 0.0, 128
    %400 = vxpose.xlu0.b32.cont [10/16] 0.0, 128
    %401 = vxpose.xlu0.b32.cont [11/16] 0.0, 128
    %402 = vxpose.xlu0.b32.cont [12/16] 0.0, 128
    %403 = vxpose.xlu0.b32.cont [13/16] 0.0, 128
    %404 = vxpose.xlu0.b32.cont [14/16] 0.0, 128
    %405 = vxpose.xlu0.b32.cont [15/16] 0.0, 128
    %406 = vxpose.xlu0.b32.end [16/16] 0.0, 128
    %v407 = vpop.trf.xlu0
    %v408 = vpop.trf.xlu0
    %v409 = vpop.trf.xlu0
    %v410 = vpop.trf.xlu0
    %v411 = vpop.trf.xlu0
    %v412 = vpop.trf.xlu0
    %v413 = vpop.trf.xlu0
    %v414 = vpop.trf.xlu0
    %v415 = vpop.trf.xlu0
    %v416 = vpop.trf.xlu0
    %v417 = vpop.trf.xlu0
    %v418 = vpop.trf.xlu0
    %v419 = vpop.trf.xlu0
    %v420 = vpop.trf.xlu0
    %v421 = vpop.trf.xlu0
    %v422 = vpop.trf.xlu0
    %s423 = scalar_lea.vmem [#allocation4], 16
    %424 = vst.msk [vmem:[%s423] sm:$0xff] %vm310, %v407
    %425 = vst.msk [vmem:[%s423 + $0x8] sm:$0xff] %vm310, %v408
    %v426 = vld [vmem:[#allocation3] sm:$0xff]
    %v427 = vld [vmem:[#allocation3 + $0x8] sm:$0xff]
    %v428 = vld [vmem:[#allocation3 + $0x10] sm:$0xff]
    %v429 = vld [vmem:[#allocation3 + $0x18] sm:$0xff]
    %v430 = vld [vmem:[#allocation4] sm:$0xff]
    %v431 = vld [vmem:[#allocation4 + $0x8] sm:$0xff]
    %v432 = vld [vmem:[#allocation4 + $0x10] sm:$0xff]
    %v433 = vld [vmem:[#allocation4 + $0x18] sm:$0xff]
    %vm434 = vcmask 39936
    %v436 = vsel %vm434, %v426, 0
    %v439 = vsel %vm434, %v427, 0
    %vm441 = vcmask 1044480
    %v443 = vsel %vm441, %v254, 0
    %445 = vmatprep.subr.mxu0 0.0
    %446 = vmatpush1.msra.mxu0 0.0
    %447 = vmatprep.subr.mxu0 0.0
    %448 = vmatpush1.msra.mxu0 0.0
    %449 = vmatprep.subr.mxu0 0.0
    %450 = vmatpush1.msra.mxu0 0.0
    %451 = vmatprep.subr.mxu0 0.0
    %452 = vmatpush1.msra.mxu0 0.0
    %453 = vmatprep.subr.mxu0 0.0
    %454 = vmatpush1.msra.mxu0 0.0
    %455 = vmatprep.subr.mxu0 0.0
    %456 = vmatpush1.msra.mxu0 0.0
    %457 = vmatprep.subr.mxu0 0.0
    %458 = vmatpush1.msra.mxu0 0.0
    %459 = vmatprep.subr.mxu0 0.0
    %460 = vmatpush1.msra.mxu0 0.0
    %461 = vmatprep.subr.mxu0 0.0
    %462 = vmatpush1.msra.mxu0 0.0
    %463 = vmatprep.subr.mxu0 0.0
    %464 = vmatpush1.msra.mxu0 0.0
    %465 = vmatprep.subr.mxu0 0.0
    %466 = vmatpush1.msra.mxu0 0.0
    %467 = vmatprep.subr.mxu0 0.0
    %468 = vmatpush1.msra.mxu0 0.0
    %469 = vmatprep.subr.mxu0 0.0
    %470 = vmatpush1.msra.mxu0 0.0
    %471 = vmatprep.subr.mxu0 0.0
    %472 = vmatpush1.msra.mxu0 0.0
    %473 = vmatprep.subr.mxu0 0.0
    %474 = vmatpush1.msra.mxu0 0.0
    %475 = vmatprep.subr.mxu0 0.0
    %476 = vmatpush1.msra.mxu0 %v443
    %477 = vmatprep.subr.mxu0 0.0
    %478 = vmatpush2.msra.mxu0 0.0
    %479 = vmatprep.subr.mxu0 0.0
    %480 = vmatpush2.msra.mxu0 0.0
    %481 = vmatprep.subr.mxu0 0.0
    %482 = vmatpush2.msra.mxu0 0.0
    %483 = vmatprep.subr.mxu0 0.0
    %484 = vmatpush2.msra.mxu0 0.0
    %485 = vmatprep.subr.mxu0 0.0
    %486 = vmatpush2.msra.mxu0 0.0
    %487 = vmatprep.subr.mxu0 0.0
    %488 = vmatpush2.msra.mxu0 0.0
    %489 = vmatprep.subr.mxu0 0.0
    %490 = vmatpush2.msra.mxu0 0.0
    %491 = vmatprep.subr.mxu0 0.0
    %492 = vmatpush2.msra.mxu0 0.0
    %493 = vmatprep.subr.mxu0 0.0
    %494 = vmatpush2.msra.mxu0 0.0
    %495 = vmatprep.subr.mxu0 0.0
    %496 = vmatpush2.msra.mxu0 0.0
    %497 = vmatprep.subr.mxu0 0.0
    %498 = vmatpush2.msra.mxu0 0.0
    %499 = vmatprep.subr.mxu0 0.0
    %500 = vmatpush2.msra.mxu0 0.0
    %501 = vmatprep.subr.mxu0 0.0
    %502 = vmatpush2.msra.mxu0 0.0
    %503 = vmatprep.subr.mxu0 0.0
    %504 = vmatpush2.msra.mxu0 0.0
    %505 = vmatprep.subr.mxu0 0.0
    %506 = vmatpush2.msra.mxu0 0.0
    %507 = vmatprep.subr.mxu0 0.0
    %508 = vmatpush2.msra.mxu0 0.0
    %509 = vmatprep.mubr.f32.mxu0 0.0
    %510 = vmatmul.mubr.f32.gmra.mxu0 %v436
    %v511 = vpop.f32.mrf.mxu0
    %v512 = vadd.f32 0.0, %v511
    %v513 = vpop.f32.mrf.mxu0
    %514 = vmatprep.mubr.f32.mxu0 0.0
    %515 = vmatmul.mubr.f32.gmra.mxu0 %v439
    %v516 = vpop.f32.mrf.mxu0
    %v517 = vadd.f32 0.0, %v516
    %v518 = vpop.f32.mrf.mxu0
    %519 = vdwg.mxu0
    %v521 = vsel %vm434, %v428, 0
    %v524 = vsel %vm434, %v429, 0
    %v527 = vsel %vm441, %v255, 0
    %529 = vmatprep.subr.mxu0 0.0
    %530 = vmatpush1.msra.mxu0 0.0
    %531 = vmatprep.subr.mxu0 0.0
    %532 = vmatpush1.msra.mxu0 0.0
    %533 = vmatprep.subr.mxu0 0.0
    %534 = vmatpush1.msra.mxu0 0.0
    %535 = vmatprep.subr.mxu0 0.0
    %536 = vmatpush1.msra.mxu0 0.0
    %537 = vmatprep.subr.mxu0 0.0
    %538 = vmatpush1.msra.mxu0 0.0
    %539 = vmatprep.subr.mxu0 0.0
    %540 = vmatpush1.msra.mxu0 0.0
    %541 = vmatprep.subr.mxu0 0.0
    %542 = vmatpush1.msra.mxu0 0.0
    %543 = vmatprep.subr.mxu0 0.0
    %544 = vmatpush1.msra.mxu0 0.0
    %545 = vmatprep.subr.mxu0 0.0
    %546 = vmatpush1.msra.mxu0 0.0
    %547 = vmatprep.subr.mxu0 0.0
    %548 = vmatpush1.msra.mxu0 0.0
    %549 = vmatprep.subr.mxu0 0.0
    %550 = vmatpush1.msra.mxu0 0.0
    %551 = vmatprep.subr.mxu0 0.0
    %552 = vmatpush1.msra.mxu0 0.0
    %553 = vmatprep.subr.mxu0 0.0
    %554 = vmatpush1.msra.mxu0 0.0
    %555 = vmatprep.subr.mxu0 0.0
    %556 = vmatpush1.msra.mxu0 0.0
    %557 = vmatprep.subr.mxu0 0.0
    %558 = vmatpush1.msra.mxu0 0.0
    %559 = vmatprep.subr.mxu0 0.0
    %560 = vmatpush1.msra.mxu0 %v527
    %561 = vmatprep.subr.mxu0 0.0
    %562 = vmatpush2.msra.mxu0 0.0
    %563 = vmatprep.subr.mxu0 0.0
    %564 = vmatpush2.msra.mxu0 0.0
    %565 = vmatprep.subr.mxu0 0.0
    %566 = vmatpush2.msra.mxu0 0.0
    %567 = vmatprep.subr.mxu0 0.0
    %568 = vmatpush2.msra.mxu0 0.0
    %569 = vmatprep.subr.mxu0 0.0
    %570 = vmatpush2.msra.mxu0 0.0
    %571 = vmatprep.subr.mxu0 0.0
    %572 = vmatpush2.msra.mxu0 0.0
    %573 = vmatprep.subr.mxu0 0.0
    %574 = vmatpush2.msra.mxu0 0.0
    %575 = vmatprep.subr.mxu0 0.0
    %576 = vmatpush2.msra.mxu0 0.0
    %577 = vmatprep.subr.mxu0 0.0
    %578 = vmatpush2.msra.mxu0 0.0
    %579 = vmatprep.subr.mxu0 0.0
    %580 = vmatpush2.msra.mxu0 0.0
    %581 = vmatprep.subr.mxu0 0.0
    %582 = vmatpush2.msra.mxu0 0.0
    %583 = vmatprep.subr.mxu0 0.0
    %584 = vmatpush2.msra.mxu0 0.0
    %585 = vmatprep.subr.mxu0 0.0
    %586 = vmatpush2.msra.mxu0 0.0
    %587 = vmatprep.subr.mxu0 0.0
    %588 = vmatpush2.msra.mxu0 0.0
    %589 = vmatprep.subr.mxu0 0.0
    %590 = vmatpush2.msra.mxu0 0.0
    %591 = vmatprep.subr.mxu0 0.0
    %592 = vmatpush2.msra.mxu0 0.0
    %593 = vmatprep.mubr.f32.mxu0 0.0
    %594 = vmatmul.mubr.f32.gmra.mxu0 %v521
    %v595 = vpop.f32.mrf.mxu0
    %v596 = vadd.f32 0.0, %v595
    %v597 = vpop.f32.mrf.mxu0
    %598 = vmatprep.mubr.f32.mxu0 0.0
    %599 = vmatmul.mubr.f32.gmra.mxu0 %v524
    %v600 = vpop.f32.mrf.mxu0
    %v601 = vadd.f32 0.0, %v600
    %v602 = vpop.f32.mrf.mxu0
    %603 = vdwg.mxu0
    %v605 = vsel %vm434, %v512, 0
    %v608 = vsel %vm434, %v517, 0
    %v611 = vsel %vm434, %v430, 0
    %v614 = vsel %vm434, %v431, 0
    %616 = vmatprep.subr.mxu0 0.0
    %617 = vmatpush1.xpose.msra.mxu0 0.0
    %618 = vmatprep.subr.mxu0 0.0
    %619 = vmatpush1.xpose.msra.mxu0 0.0
    %620 = vmatprep.subr.mxu0 0.0
    %621 = vmatpush1.xpose.msra.mxu0 0.0
    %622 = vmatprep.subr.mxu0 0.0
    %623 = vmatpush1.xpose.msra.mxu0 0.0
    %624 = vmatprep.subr.mxu0 0.0
    %625 = vmatpush1.xpose.msra.mxu0 0.0
    %626 = vmatprep.subr.mxu0 0.0
    %627 = vmatpush1.xpose.msra.mxu0 0.0
    %628 = vmatprep.subr.mxu0 0.0
    %629 = vmatpush1.xpose.msra.mxu0 0.0
    %630 = vmatprep.subr.mxu0 0.0
    %631 = vmatpush1.xpose.msra.mxu0 0.0
    %632 = vmatprep.subr.mxu0 0.0
    %633 = vmatpush1.xpose.msra.mxu0 0.0
    %634 = vmatprep.subr.mxu0 0.0
    %635 = vmatpush1.xpose.msra.mxu0 0.0
    %636 = vmatprep.subr.mxu0 0.0
    %637 = vmatpush1.xpose.msra.mxu0 0.0
    %638 = vmatprep.subr.mxu0 0.0
    %639 = vmatpush1.xpose.msra.mxu0 0.0
    %640 = vmatprep.subr.mxu0 0.0
    %641 = vmatpush1.xpose.msra.mxu0 0.0
    %642 = vmatprep.subr.mxu0 0.0
    %643 = vmatpush1.xpose.msra.mxu0 0.0
    %644 = vmatprep.subr.mxu0 0.0
    %645 = vmatpush1.xpose.msra.mxu0 %v614
    %646 = vmatprep.subr.mxu0 0.0
    %647 = vmatpush1.xpose.msra.mxu0 %v611
    %648 = vmatprep.subr.mxu0 0.0
    %649 = vmatpush2.xpose.msra.mxu0 0.0
    %650 = vmatprep.subr.mxu0 0.0
    %651 = vmatpush2.xpose.msra.mxu0 0.0
    %652 = vmatprep.subr.mxu0 0.0
    %653 = vmatpush2.xpose.msra.mxu0 0.0
    %654 = vmatprep.subr.mxu0 0.0
    %655 = vmatpush2.xpose.msra.mxu0 0.0
    %656 = vmatprep.subr.mxu0 0.0
    %657 = vmatpush2.xpose.msra.mxu0 0.0
    %658 = vmatprep.subr.mxu0 0.0
    %659 = vmatpush2.xpose.msra.mxu0 0.0
    %660 = vmatprep.subr.mxu0 0.0
    %661 = vmatpush2.xpose.msra.mxu0 0.0
    %662 = vmatprep.subr.mxu0 0.0
    %663 = vmatpush2.xpose.msra.mxu0 0.0
    %664 = vmatprep.subr.mxu0 0.0
    %665 = vmatpush2.xpose.msra.mxu0 0.0
    %666 = vmatprep.subr.mxu0 0.0
    %667 = vmatpush2.xpose.msra.mxu0 0.0
    %668 = vmatprep.subr.mxu0 0.0
    %669 = vmatpush2.xpose.msra.mxu0 0.0
    %670 = vmatprep.subr.mxu0 0.0
    %671 = vmatpush2.xpose.msra.mxu0 0.0
    %672 = vmatprep.subr.mxu0 0.0
    %673 = vmatpush2.xpose.msra.mxu0 0.0
    %674 = vmatprep.subr.mxu0 0.0
    %675 = vmatpush2.xpose.msra.mxu0 0.0
    %676 = vmatprep.subr.mxu0 0.0
    %677 = vmatpush2.xpose.msra.mxu0 0.0
    %678 = vmatprep.subr.mxu0 0.0
    %679 = vmatpush2.xpose.msra.mxu0 0.0
    %680 = vmatprep.mubr.f32.mxu0 0.0
    %681 = vmatmul.mubr.f32.gmra.mxu0 %v605
    %v682 = vpop.f32.mrf.mxu0
    %v683 = vadd.f32 0.0, %v682
    %v684 = vpop.f32.mrf.mxu0
    %685 = vmatprep.mubr.f32.mxu0 0.0
    %686 = vmatmul.mubr.f32.gmra.mxu0 %v608
    %v687 = vpop.f32.mrf.mxu0
    %v688 = vadd.f32 0.0, %v687
    %v689 = vpop.f32.mrf.mxu0
    %690 = vdwg.mxu0
    %v692 = vsel %vm434, %v596, 0
    %v695 = vsel %vm434, %v601, 0
    %v698 = vsel %vm434, %v432, 0
    %v701 = vsel %vm434, %v433, 0
    %703 = vmatprep.subr.mxu0 0.0
    %704 = vmatpush1.xpose.msra.mxu0 0.0
    %705 = vmatprep.subr.mxu0 0.0
    %706 = vmatpush1.xpose.msra.mxu0 0.0
    %707 = vmatprep.subr.mxu0 0.0
    %708 = vmatpush1.xpose.msra.mxu0 0.0
    %709 = vmatprep.subr.mxu0 0.0
    %710 = vmatpush1.xpose.msra.mxu0 0.0
    %711 = vmatprep.subr.mxu0 0.0
    %712 = vmatpush1.xpose.msra.mxu0 0.0
    %713 = vmatprep.subr.mxu0 0.0
    %714 = vmatpush1.xpose.msra.mxu0 0.0
    %715 = vmatprep.subr.mxu0 0.0
    %716 = vmatpush1.xpose.msra.mxu0 0.0
    %717 = vmatprep.subr.mxu0 0.0
    %718 = vmatpush1.xpose.msra.mxu0 0.0
    %719 = vmatprep.subr.mxu0 0.0
    %720 = vmatpush1.xpose.msra.mxu0 0.0
    %721 = vmatprep.subr.mxu0 0.0
    %722 = vmatpush1.xpose.msra.mxu0 0.0
    %723 = vmatprep.subr.mxu0 0.0
    %724 = vmatpush1.xpose.msra.mxu0 0.0
    %725 = vmatprep.subr.mxu0 0.0
    %726 = vmatpush1.xpose.msra.mxu0 0.0
    %727 = vmatprep.subr.mxu0 0.0
    %728 = vmatpush1.xpose.msra.mxu0 0.0
    %729 = vmatprep.subr.mxu0 0.0
    %730 = vmatpush1.xpose.msra.mxu0 0.0
    %731 = vmatprep.subr.mxu0 0.0
    %732 = vmatpush1.xpose.msra.mxu0 %v701
    %733 = vmatprep.subr.mxu0 0.0
    %734 = vmatpush1.xpose.msra.mxu0 %v698
    %735 = vmatprep.subr.mxu0 0.0
    %736 = vmatpush2.xpose.msra.mxu0 0.0
    %737 = vmatprep.subr.mxu0 0.0
    %738 = vmatpush2.xpose.msra.mxu0 0.0
    %739 = vmatprep.subr.mxu0 0.0
    %740 = vmatpush2.xpose.msra.mxu0 0.0
    %741 = vmatprep.subr.mxu0 0.0
    %742 = vmatpush2.xpose.msra.mxu0 0.0
    %743 = vmatprep.subr.mxu0 0.0
    %744 = vmatpush2.xpose.msra.mxu0 0.0
    %745 = vmatprep.subr.mxu0 0.0
    %746 = vmatpush2.xpose.msra.mxu0 0.0
    %747 = vmatprep.subr.mxu0 0.0
    %748 = vmatpush2.xpose.msra.mxu0 0.0
    %749 = vmatprep.subr.mxu0 0.0
    %750 = vmatpush2.xpose.msra.mxu0 0.0
    %751 = vmatprep.subr.mxu0 0.0
    %752 = vmatpush2.xpose.msra.mxu0 0.0
    %753 = vmatprep.subr.mxu0 0.0
    %754 = vmatpush2.xpose.msra.mxu0 0.0
    %755 = vmatprep.subr.mxu0 0.0
    %756 = vmatpush2.xpose.msra.mxu0 0.0
    %757 = vmatprep.subr.mxu0 0.0
    %758 = vmatpush2.xpose.msra.mxu0 0.0
    %759 = vmatprep.subr.mxu0 0.0
    %760 = vmatpush2.xpose.msra.mxu0 0.0
    %761 = vmatprep.subr.mxu0 0.0
    %762 = vmatpush2.xpose.msra.mxu0 0.0
    %763 = vmatprep.subr.mxu0 0.0
    %764 = vmatpush2.xpose.msra.mxu0 0.0
    %765 = vmatprep.subr.mxu0 0.0
    %766 = vmatpush2.xpose.msra.mxu0 0.0
    %767 = vmatprep.mubr.f32.mxu0 0.0
    %768 = vmatmul.mubr.f32.gmra.mxu0 %v692
    %v769 = vpop.f32.mrf.mxu0
    %v770 = vadd.f32 0.0, %v769
    %v771 = vpop.f32.mrf.mxu0
    %772 = vmatprep.mubr.f32.mxu0 0.0
    %773 = vmatmul.mubr.f32.gmra.mxu0 %v695
    %v774 = vpop.f32.mrf.mxu0
    %v775 = vadd.f32 0.0, %v774
    %v776 = vpop.f32.mrf.mxu0
    %777 = vdwg.mxu0
    %v778 = vxor.u32 %v683, 2147483648
    %v779 = vxor.u32 %v688, 2147483648
    %v780 = vxor.u32 %v770, 2147483648
    %v781 = vxor.u32 %v775, 2147483648
    %v782 = vmul.f32 %v778, 1.442695
    %v783 = vpow.pop %v782
    %v784 = vmul.f32 %v779, 1.442695
    %v785 = vpow.pop %v784
    %v786 = vmul.f32 %v780, 1.442695
    %v787 = vpow.pop %v786
    %v788 = vmul.f32 %v781, 1.442695
    %v789 = vpow.pop %v788
    %v790 = vadd.f32 %v783, 1.0
    %v791 = vadd.f32 %v785, 1.0
    %v792 = vadd.f32 %v787, 1.0
    %v793 = vadd.f32 %v789, 1.0
    %v794 = vrcp.pop %v790
    %v795 = vmul.f32 1.0, %v794
    %v796 = vrcp.pop %v791
    %v797 = vmul.f32 1.0, %v796
    %v798 = vrcp.pop %v792
    %v799 = vmul.f32 1.0, %v798
    %v800 = vrcp.pop %v793
    %v801 = vmul.f32 1.0, %v800
    %v802 = vmul.f32 %v683, %v795
    %v803 = vmul.f32 %v688, %v797
    %v804 = vmul.f32 %v770, %v799
    %v805 = vmul.f32 %v775, %v801
    %v807 = vsel %vm237, %v802, 0
    %v810 = vsel %vm237, %v803, 0
    %812 = vmatprep.subr.mxu0 0.0
    %813 = vmatpush1.msra.mxu0 0.0
    %814 = vmatprep.subr.mxu0 0.0
    %815 = vmatpush1.msra.mxu0 0.0
    %816 = vmatprep.subr.mxu0 0.0
    %817 = vmatpush1.msra.mxu0 0.0
    %818 = vmatprep.subr.mxu0 0.0
    %819 = vmatpush1.msra.mxu0 0.0
    %820 = vmatprep.subr.mxu0 0.0
    %821 = vmatpush1.msra.mxu0 0.0
    %822 = vmatprep.subr.mxu0 0.0
    %823 = vmatpush1.msra.mxu0 0.0
    %824 = vmatprep.subr.mxu0 0.0
    %825 = vmatpush1.msra.mxu0 0.0
    %826 = vmatprep.subr.mxu0 0.0
    %827 = vmatpush1.msra.mxu0 0.0
    %828 = vmatprep.subr.mxu0 0.0
    %829 = vmatpush1.msra.mxu0 0.0
    %830 = vmatprep.subr.mxu0 0.0
    %831 = vmatpush1.msra.mxu0 0.0
    %832 = vmatprep.subr.mxu0 0.0
    %833 = vmatpush1.msra.mxu0 0.0
    %834 = vmatprep.subr.mxu0 0.0
    %835 = vmatpush1.msra.mxu0 0.0
    %836 = vmatprep.subr.mxu0 0.0
    %837 = vmatpush1.msra.mxu0 0.0
    %838 = vmatprep.subr.mxu0 0.0
    %839 = vmatpush1.msra.mxu0 0.0
    %840 = vmatprep.subr.mxu0 0.0
    %841 = vmatpush1.msra.mxu0 %v257
    %842 = vmatprep.subr.mxu0 0.0
    %843 = vmatpush1.msra.mxu0 %v256
    %844 = vmatprep.subr.mxu0 0.0
    %845 = vmatpush2.msra.mxu0 0.0
    %846 = vmatprep.subr.mxu0 0.0
    %847 = vmatpush2.msra.mxu0 0.0
    %848 = vmatprep.subr.mxu0 0.0
    %849 = vmatpush2.msra.mxu0 0.0
    %850 = vmatprep.subr.mxu0 0.0
    %851 = vmatpush2.msra.mxu0 0.0
    %852 = vmatprep.subr.mxu0 0.0
    %853 = vmatpush2.msra.mxu0 0.0
    %854 = vmatprep.subr.mxu0 0.0
    %855 = vmatpush2.msra.mxu0 0.0
    %856 = vmatprep.subr.mxu0 0.0
    %857 = vmatpush2.msra.mxu0 0.0
    %858 = vmatprep.subr.mxu0 0.0
    %859 = vmatpush2.msra.mxu0 0.0
    %860 = vmatprep.subr.mxu0 0.0
    %861 = vmatpush2.msra.mxu0 0.0
    %862 = vmatprep.subr.mxu0 0.0
    %863 = vmatpush2.msra.mxu0 0.0
    %864 = vmatprep.subr.mxu0 0.0
    %865 = vmatpush2.msra.mxu0 0.0
    %866 = vmatprep.subr.mxu0 0.0
    %867 = vmatpush2.msra.mxu0 0.0
    %868 = vmatprep.subr.mxu0 0.0
    %869 = vmatpush2.msra.mxu0 0.0
    %870 = vmatprep.subr.mxu0 0.0
    %871 = vmatpush2.msra.mxu0 0.0
    %872 = vmatprep.subr.mxu0 0.0
    %873 = vmatpush2.msra.mxu0 0.0
    %874 = vmatprep.subr.mxu0 0.0
    %875 = vmatpush2.msra.mxu0 0.0
    %876 = vmatprep.mubr.f32.mxu0 0.0
    %877 = vmatmul.mubr.f32.gmra.mxu0 %v807
    %v878 = vpop.f32.mrf.mxu0
    %v879 = vadd.f32 0.0, %v878
    %v880 = vpop.f32.mrf.mxu0
    %881 = vmatprep.mubr.f32.mxu0 0.0
    %882 = vmatmul.mubr.f32.gmra.mxu0 %v810
    %v883 = vpop.f32.mrf.mxu0
    %v884 = vadd.f32 0.0, %v883
    %v885 = vpop.f32.mrf.mxu0
    %886 = vdwg.mxu0
    %v888 = vsel %vm237, %v804, 0
    %v891 = vsel %vm237, %v805, 0
    %893 = vmatprep.subr.mxu0 0.0
    %894 = vmatpush1.msra.mxu0 0.0
    %895 = vmatprep.subr.mxu0 0.0
    %896 = vmatpush1.msra.mxu0 0.0
    %897 = vmatprep.subr.mxu0 0.0
    %898 = vmatpush1.msra.mxu0 0.0
    %899 = vmatprep.subr.mxu0 0.0
    %900 = vmatpush1.msra.mxu0 0.0
    %901 = vmatprep.subr.mxu0 0.0
    %902 = vmatpush1.msra.mxu0 0.0
    %903 = vmatprep.subr.mxu0 0.0
    %904 = vmatpush1.msra.mxu0 0.0
    %905 = vmatprep.subr.mxu0 0.0
    %906 = vmatpush1.msra.mxu0 0.0
    %907 = vmatprep.subr.mxu0 0.0
    %908 = vmatpush1.msra.mxu0 0.0
    %909 = vmatprep.subr.mxu0 0.0
    %910 = vmatpush1.msra.mxu0 0.0
    %911 = vmatprep.subr.mxu0 0.0
    %912 = vmatpush1.msra.mxu0 0.0
    %913 = vmatprep.subr.mxu0 0.0
    %914 = vmatpush1.msra.mxu0 0.0
    %915 = vmatprep.subr.mxu0 0.0
    %916 = vmatpush1.msra.mxu0 0.0
    %917 = vmatprep.subr.mxu0 0.0
    %918 = vmatpush1.msra.mxu0 0.0
    %919 = vmatprep.subr.mxu0 0.0
    %920 = vmatpush1.msra.mxu0 0.0
    %921 = vmatprep.subr.mxu0 0.0
    %922 = vmatpush1.msra.mxu0 %v259
    %923 = vmatprep.subr.mxu0 0.0
    %924 = vmatpush1.msra.mxu0 %v258
    %925 = vmatprep.subr.mxu0 0.0
    %926 = vmatpush2.msra.mxu0 0.0
    %927 = vmatprep.subr.mxu0 0.0
    %928 = vmatpush2.msra.mxu0 0.0
    %929 = vmatprep.subr.mxu0 0.0
    %930 = vmatpush2.msra.mxu0 0.0
    %931 = vmatprep.subr.mxu0 0.0
    %932 = vmatpush2.msra.mxu0 0.0
    %933 = vmatprep.subr.mxu0 0.0
    %934 = vmatpush2.msra.mxu0 0.0
    %935 = vmatprep.subr.mxu0 0.0
    %936 = vmatpush2.msra.mxu0 0.0
    %937 = vmatprep.subr.mxu0 0.0
    %938 = vmatpush2.msra.mxu0 0.0
    %939 = vmatprep.subr.mxu0 0.0
    %940 = vmatpush2.msra.mxu0 0.0
    %941 = vmatprep.subr.mxu0 0.0
    %942 = vmatpush2.msra.mxu0 0.0
    %943 = vmatprep.subr.mxu0 0.0
    %944 = vmatpush2.msra.mxu0 0.0
    %945 = vmatprep.subr.mxu0 0.0
    %946 = vmatpush2.msra.mxu0 0.0
    %947 = vmatprep.subr.mxu0 0.0
    %948 = vmatpush2.msra.mxu0 0.0
    %949 = vmatprep.subr.mxu0 0.0
    %950 = vmatpush2.msra.mxu0 0.0
    %951 = vmatprep.subr.mxu0 0.0
    %952 = vmatpush2.msra.mxu0 0.0
    %953 = vmatprep.subr.mxu0 0.0
    %954 = vmatpush2.msra.mxu0 0.0
    %955 = vmatprep.subr.mxu0 0.0
    %956 = vmatpush2.msra.mxu0 0.0
    %957 = vmatprep.mubr.f32.mxu0 0.0
    %958 = vmatmul.mubr.f32.gmra.mxu0 %v888
    %v959 = vpop.f32.mrf.mxu0
    %v960 = vadd.f32 0.0, %v959
    %v961 = vpop.f32.mrf.mxu0
    %962 = vmatprep.mubr.f32.mxu0 0.0
    %963 = vmatmul.mubr.f32.gmra.mxu0 %v891
    %v964 = vpop.f32.mrf.mxu0
    %v965 = vadd.f32 0.0, %v964
    %v966 = vpop.f32.mrf.mxu0
    %967 = vdwg.mxu0
    %968 = vmatprep.subr.mxu0 0.0
    %969 = vmatpush1.msra.mxu0 0.0
    %970 = vmatprep.subr.mxu0 0.0
    %971 = vmatpush1.msra.mxu0 0.0
    %972 = vmatprep.subr.mxu0 0.0
    %973 = vmatpush1.msra.mxu0 0.0
    %974 = vmatprep.subr.mxu0 0.0
    %975 = vmatpush1.msra.mxu0 0.0
    %976 = vmatprep.subr.mxu0 0.0
    %977 = vmatpush1.msra.mxu0 0.0
    %978 = vmatprep.subr.mxu0 0.0
    %979 = vmatpush1.msra.mxu0 0.0
    %980 = vmatprep.subr.mxu0 0.0
    %981 = vmatpush1.msra.mxu0 0.0
    %982 = vmatprep.subr.mxu0 0.0
    %983 = vmatpush1.msra.mxu0 0.0
    %984 = vmatprep.subr.mxu0 0.0
    %985 = vmatpush1.msra.mxu0 0.0
    %986 = vmatprep.subr.mxu0 0.0
    %987 = vmatpush1.msra.mxu0 0.0
    %988 = vmatprep.subr.mxu0 0.0
    %989 = vmatpush1.msra.mxu0 0.0
    %990 = vmatprep.subr.mxu0 0.0
    %991 = vmatpush1.msra.mxu0 0.0
    %992 = vmatprep.subr.mxu0 0.0
    %993 = vmatpush1.msra.mxu0 0.0
    %994 = vmatprep.subr.mxu0 0.0
    %995 = vmatpush1.msra.mxu0 0.0
    %996 = vmatprep.subr.mxu0 0.0
    %997 = vmatpush1.msra.mxu0 %v261
    %998 = vmatprep.subr.mxu0 0.0
    %999 = vmatpush1.msra.mxu0 %v260
    %1000 = vmatprep.subr.mxu0 0.0
    %1001 = vmatpush2.msra.mxu0 0.0
    %1002 = vmatprep.subr.mxu0 0.0
    %1003 = vmatpush2.msra.mxu0 0.0
    %1004 = vmatprep.subr.mxu0 0.0
    %1005 = vmatpush2.msra.mxu0 0.0
    %1006 = vmatprep.subr.mxu0 0.0
    %1007 = vmatpush2.msra.mxu0 0.0
    %1008 = vmatprep.subr.mxu0 0.0
    %1009 = vmatpush2.msra.mxu0 0.0
    %1010 = vmatprep.subr.mxu0 0.0
    %1011 = vmatpush2.msra.mxu0 0.0
    %1012 = vmatprep.subr.mxu0 0.0
    %1013 = vmatpush2.msra.mxu0 0.0
    %1014 = vmatprep.subr.mxu0 0.0
    %1015 = vmatpush2.msra.mxu0 0.0
    %1016 = vmatprep.subr.mxu0 0.0
    %1017 = vmatpush2.msra.mxu0 0.0
    %1018 = vmatprep.subr.mxu0 0.0
    %1019 = vmatpush2.msra.mxu0 0.0
    %1020 = vmatprep.subr.mxu0 0.0
    %1021 = vmatpush2.msra.mxu0 0.0
    %1022 = vmatprep.subr.mxu0 0.0
    %1023 = vmatpush2.msra.mxu0 0.0
    %1024 = vmatprep.subr.mxu0 0.0
    %1025 = vmatpush2.msra.mxu0 0.0
    %1026 = vmatprep.subr.mxu0 0.0
    %1027 = vmatpush2.msra.mxu0 0.0
    %1028 = vmatprep.subr.mxu0 0.0
    %1029 = vmatpush2.msra.mxu0 0.0
    %1030 = vmatprep.subr.mxu0 0.0
    %1031 = vmatpush2.msra.mxu0 0.0
    %1032 = vmatprep.mubr.f32.mxu0 0.0
    %1033 = vmatmul.mubr.f32.gmra.mxu0 %v807
    %v1034 = vpop.f32.mrf.mxu0
    %v1035 = vadd.f32 0.0, %v1034
    %v1036 = vpop.f32.mrf.mxu0
    %1037 = vmatprep.mubr.f32.mxu0 0.0
    %1038 = vmatmul.mubr.f32.gmra.mxu0 %v810
    %v1039 = vpop.f32.mrf.mxu0
    %v1040 = vadd.f32 0.0, %v1039
    %v1041 = vpop.f32.mrf.mxu0
    %1042 = vdwg.mxu0
    %1043 = vmatprep.subr.mxu0 0.0
    %1044 = vmatpush1.msra.mxu0 0.0
    %1045 = vmatprep.subr.mxu0 0.0
    %1046 = vmatpush1.msra.mxu0 0.0
    %1047 = vmatprep.subr.mxu0 0.0
    %1048 = vmatpush1.msra.mxu0 0.0
    %1049 = vmatprep.subr.mxu0 0.0
    %1050 = vmatpush1.msra.mxu0 0.0
    %1051 = vmatprep.subr.mxu0 0.0
    %1052 = vmatpush1.msra.mxu0 0.0
    %1053 = vmatprep.subr.mxu0 0.0
    %1054 = vmatpush1.msra.mxu0 0.0
    %1055 = vmatprep.subr.mxu0 0.0
    %1056 = vmatpush1.msra.mxu0 0.0
    %1057 = vmatprep.subr.mxu0 0.0
    %1058 = vmatpush1.msra.mxu0 0.0
    %1059 = vmatprep.subr.mxu0 0.0
    %1060 = vmatpush1.msra.mxu0 0.0
    %1061 = vmatprep.subr.mxu0 0.0
    %1062 = vmatpush1.msra.mxu0 0.0
    %1063 = vmatprep.subr.mxu0 0.0
    %1064 = vmatpush1.msra.mxu0 0.0
    %1065 = vmatprep.subr.mxu0 0.0
    %1066 = vmatpush1.msra.mxu0 0.0
    %1067 = vmatprep.subr.mxu0 0.0
    %1068 = vmatpush1.msra.mxu0 0.0
    %1069 = vmatprep.subr.mxu0 0.0
    %1070 = vmatpush1.msra.mxu0 0.0
    %1071 = vmatprep.subr.mxu0 0.0
    %1072 = vmatpush1.msra.mxu0 %v263
    %1073 = vmatprep.subr.mxu0 0.0
    %1074 = vmatpush1.msra.mxu0 %v262
    %1075 = vmatprep.subr.mxu0 0.0
    %1076 = vmatpush2.msra.mxu0 0.0
    %1077 = vmatprep.subr.mxu0 0.0
    %1078 = vmatpush2.msra.mxu0 0.0
    %1079 = vmatprep.subr.mxu0 0.0
    %1080 = vmatpush2.msra.mxu0 0.0
    %1081 = vmatprep.subr.mxu0 0.0
    %1082 = vmatpush2.msra.mxu0 0.0
    %1083 = vmatprep.subr.mxu0 0.0
    %1084 = vmatpush2.msra.mxu0 0.0
    %1085 = vmatprep.subr.mxu0 0.0
    %1086 = vmatpush2.msra.mxu0 0.0
    %1087 = vmatprep.subr.mxu0 0.0
    %1088 = vmatpush2.msra.mxu0 0.0
    %1089 = vmatprep.subr.mxu0 0.0
    %1090 = vmatpush2.msra.mxu0 0.0
    %1091 = vmatprep.subr.mxu0 0.0
    %1092 = vmatpush2.msra.mxu0 0.0
    %1093 = vmatprep.subr.mxu0 0.0
    %1094 = vmatpush2.msra.mxu0 0.0
    %1095 = vmatprep.subr.mxu0 0.0
    %1096 = vmatpush2.msra.mxu0 0.0
    %1097 = vmatprep.subr.mxu0 0.0
    %1098 = vmatpush2.msra.mxu0 0.0
    %1099 = vmatprep.subr.mxu0 0.0
    %1100 = vmatpush2.msra.mxu0 0.0
    %1101 = vmatprep.subr.mxu0 0.0
    %1102 = vmatpush2.msra.mxu0 0.0
    %1103 = vmatprep.subr.mxu0 0.0
    %1104 = vmatpush2.msra.mxu0 0.0
    %1105 = vmatprep.subr.mxu0 0.0
    %1106 = vmatpush2.msra.mxu0 0.0
    %1107 = vmatprep.mubr.f32.mxu0 0.0
    %1108 = vmatmul.mubr.f32.gmra.mxu0 %v888
    %v1109 = vpop.f32.mrf.mxu0
    %v1110 = vadd.f32 0.0, %v1109
    %v1111 = vpop.f32.mrf.mxu0
    %1112 = vmatprep.mubr.f32.mxu0 0.0
    %1113 = vmatmul.mubr.f32.gmra.mxu0 %v891
    %v1114 = vpop.f32.mrf.mxu0
    %v1115 = vadd.f32 0.0, %v1114
    %v1116 = vpop.f32.mrf.mxu0
    %1117 = vdwg.mxu0
    %1118 = vmatprep.subr.mxu0 0.0
    %1119 = vmatpush1.msra.mxu0 0.0
    %1120 = vmatprep.subr.mxu0 0.0
    %1121 = vmatpush1.msra.mxu0 0.0
    %1122 = vmatprep.subr.mxu0 0.0
    %1123 = vmatpush1.msra.mxu0 0.0
    %1124 = vmatprep.subr.mxu0 0.0
    %1125 = vmatpush1.msra.mxu0 0.0
    %1126 = vmatprep.subr.mxu0 0.0
    %1127 = vmatpush1.msra.mxu0 0.0
    %1128 = vmatprep.subr.mxu0 0.0
    %1129 = vmatpush1.msra.mxu0 0.0
    %1130 = vmatprep.subr.mxu0 0.0
    %1131 = vmatpush1.msra.mxu0 0.0
    %1132 = vmatprep.subr.mxu0 0.0
    %1133 = vmatpush1.msra.mxu0 0.0
    %1134 = vmatprep.subr.mxu0 0.0
    %1135 = vmatpush1.msra.mxu0 0.0
    %1136 = vmatprep.subr.mxu0 0.0
    %1137 = vmatpush1.msra.mxu0 0.0
    %1138 = vmatprep.subr.mxu0 0.0
    %1139 = vmatpush1.msra.mxu0 0.0
    %1140 = vmatprep.subr.mxu0 0.0
    %1141 = vmatpush1.msra.mxu0 0.0
    %1142 = vmatprep.subr.mxu0 0.0
    %1143 = vmatpush1.msra.mxu0 0.0
    %1144 = vmatprep.subr.mxu0 0.0
    %1145 = vmatpush1.msra.mxu0 0.0
    %1146 = vmatprep.subr.mxu0 0.0
    %1147 = vmatpush1.msra.mxu0 %v265
    %1148 = vmatprep.subr.mxu0 0.0
    %1149 = vmatpush1.msra.mxu0 %v264
    %1150 = vmatprep.subr.mxu0 0.0
    %1151 = vmatpush2.msra.mxu0 0.0
    %1152 = vmatprep.subr.mxu0 0.0
    %1153 = vmatpush2.msra.mxu0 0.0
    %1154 = vmatprep.subr.mxu0 0.0
    %1155 = vmatpush2.msra.mxu0 0.0
    %1156 = vmatprep.subr.mxu0 0.0
    %1157 = vmatpush2.msra.mxu0 0.0
    %1158 = vmatprep.subr.mxu0 0.0
    %1159 = vmatpush2.msra.mxu0 0.0
    %1160 = vmatprep.subr.mxu0 0.0
    %1161 = vmatpush2.msra.mxu0 0.0
    %1162 = vmatprep.subr.mxu0 0.0
    %1163 = vmatpush2.msra.mxu0 0.0
    %1164 = vmatprep.subr.mxu0 0.0
    %1165 = vmatpush2.msra.mxu0 0.0
    %1166 = vmatprep.subr.mxu0 0.0
    %1167 = vmatpush2.msra.mxu0 0.0
    %1168 = vmatprep.subr.mxu0 0.0
    %1169 = vmatpush2.msra.mxu0 0.0
    %1170 = vmatprep.subr.mxu0 0.0
    %1171 = vmatpush2.msra.mxu0 0.0
    %1172 = vmatprep.subr.mxu0 0.0
    %1173 = vmatpush2.msra.mxu0 0.0
    %1174 = vmatprep.subr.mxu0 0.0
    %1175 = vmatpush2.msra.mxu0 0.0
    %1176 = vmatprep.subr.mxu0 0.0
    %1177 = vmatpush2.msra.mxu0 0.0
    %1178 = vmatprep.subr.mxu0 0.0
    %1179 = vmatpush2.msra.mxu0 0.0
    %1180 = vmatprep.subr.mxu0 0.0
    %1181 = vmatpush2.msra.mxu0 0.0
    %1182 = vmatprep.mubr.f32.mxu0 0.0
    %1183 = vmatmul.mubr.f32.gmra.mxu0 %v807
    %v1184 = vpop.f32.mrf.mxu0
    %v1185 = vadd.f32 0.0, %v1184
    %v1186 = vpop.f32.mrf.mxu0
    %1187 = vmatprep.mubr.f32.mxu0 0.0
    %1188 = vmatmul.mubr.f32.gmra.mxu0 %v810
    %v1189 = vpop.f32.mrf.mxu0
    %v1190 = vadd.f32 0.0, %v1189
    %v1191 = vpop.f32.mrf.mxu0
    %1192 = vdwg.mxu0
    %1193 = vmatprep.subr.mxu0 0.0
    %1194 = vmatpush1.msra.mxu0 0.0
    %1195 = vmatprep.subr.mxu0 0.0
    %1196 = vmatpush1.msra.mxu0 0.0
    %1197 = vmatprep.subr.mxu0 0.0
    %1198 = vmatpush1.msra.mxu0 0.0
    %1199 = vmatprep.subr.mxu0 0.0
    %1200 = vmatpush1.msra.mxu0 0.0
    %1201 = vmatprep.subr.mxu0 0.0
    %1202 = vmatpush1.msra.mxu0 0.0
    %1203 = vmatprep.subr.mxu0 0.0
    %1204 = vmatpush1.msra.mxu0 0.0
    %1205 = vmatprep.subr.mxu0 0.0
    %1206 = vmatpush1.msra.mxu0 0.0
    %1207 = vmatprep.subr.mxu0 0.0
    %1208 = vmatpush1.msra.mxu0 0.0
    %1209 = vmatprep.subr.mxu0 0.0
    %1210 = vmatpush1.msra.mxu0 0.0
    %1211 = vmatprep.subr.mxu0 0.0
    %1212 = vmatpush1.msra.mxu0 0.0
    %1213 = vmatprep.subr.mxu0 0.0
    %1214 = vmatpush1.msra.mxu0 0.0
    %1215 = vmatprep.subr.mxu0 0.0
    %1216 = vmatpush1.msra.mxu0 0.0
    %1217 = vmatprep.subr.mxu0 0.0
    %1218 = vmatpush1.msra.mxu0 0.0
    %1219 = vmatprep.subr.mxu0 0.0
    %1220 = vmatpush1.msra.mxu0 0.0
    %1221 = vmatprep.subr.mxu0 0.0
    %1222 = vmatpush1.msra.mxu0 %v267
    %1223 = vmatprep.subr.mxu0 0.0
    %1224 = vmatpush1.msra.mxu0 %v266
    %1225 = vmatprep.subr.mxu0 0.0
    %1226 = vmatpush2.msra.mxu0 0.0
    %1227 = vmatprep.subr.mxu0 0.0
    %1228 = vmatpush2.msra.mxu0 0.0
    %1229 = vmatprep.subr.mxu0 0.0
    %1230 = vmatpush2.msra.mxu0 0.0
    %1231 = vmatprep.subr.mxu0 0.0
    %1232 = vmatpush2.msra.mxu0 0.0
    %1233 = vmatprep.subr.mxu0 0.0
    %1234 = vmatpush2.msra.mxu0 0.0
    %1235 = vmatprep.subr.mxu0 0.0
    %1236 = vmatpush2.msra.mxu0 0.0
    %1237 = vmatprep.subr.mxu0 0.0
    %1238 = vmatpush2.msra.mxu0 0.0
    %1239 = vmatprep.subr.mxu0 0.0
    %1240 = vmatpush2.msra.mxu0 0.0
    %1241 = vmatprep.subr.mxu0 0.0
    %1242 = vmatpush2.msra.mxu0 0.0
    %1243 = vmatprep.subr.mxu0 0.0
    %1244 = vmatpush2.msra.mxu0 0.0
    %1245 = vmatprep.subr.mxu0 0.0
    %1246 = vmatpush2.msra.mxu0 0.0
    %1247 = vmatprep.subr.mxu0 0.0
    %1248 = vmatpush2.msra.mxu0 0.0
    %1249 = vmatprep.subr.mxu0 0.0
    %1250 = vmatpush2.msra.mxu0 0.0
    %1251 = vmatprep.subr.mxu0 0.0
    %1252 = vmatpush2.msra.mxu0 0.0
    %1253 = vmatprep.subr.mxu0 0.0
    %1254 = vmatpush2.msra.mxu0 0.0
    %1255 = vmatprep.subr.mxu0 0.0
    %1256 = vmatpush2.msra.mxu0 0.0
    %1257 = vmatprep.mubr.f32.mxu0 0.0
    %1258 = vmatmul.mubr.f32.gmra.mxu0 %v888
    %v1259 = vpop.f32.mrf.mxu0
    %v1260 = vadd.f32 0.0, %v1259
    %v1261 = vpop.f32.mrf.mxu0
    %1262 = vmatprep.mubr.f32.mxu0 0.0
    %1263 = vmatmul.mubr.f32.gmra.mxu0 %v891
    %v1264 = vpop.f32.mrf.mxu0
    %v1265 = vadd.f32 0.0, %v1264
    %v1266 = vpop.f32.mrf.mxu0
    %1267 = vdwg.mxu0
    %v1269 = vsel %vm237, %v268, 0
    %v1272 = vsel %vm237, %v269, 0
    %1274 = vmatprep.subr.mxu0 0.0
    %1275 = vmatpush1.msra.mxu0 0.0
    %1276 = vmatprep.subr.mxu0 0.0
    %1277 = vmatpush1.msra.mxu0 0.0
    %1278 = vmatprep.subr.mxu0 0.0
    %1279 = vmatpush1.msra.mxu0 0.0
    %1280 = vmatprep.subr.mxu0 0.0
    %1281 = vmatpush1.msra.mxu0 0.0
    %1282 = vmatprep.subr.mxu0 0.0
    %1283 = vmatpush1.msra.mxu0 0.0
    %1284 = vmatprep.subr.mxu0 0.0
    %1285 = vmatpush1.msra.mxu0 0.0
    %1286 = vmatprep.subr.mxu0 0.0
    %1287 = vmatpush1.msra.mxu0 0.0
    %1288 = vmatprep.subr.mxu0 0.0
    %1289 = vmatpush1.msra.mxu0 0.0
    %1290 = vmatprep.subr.mxu0 0.0
    %1291 = vmatpush1.msra.mxu0 0.0
    %1292 = vmatprep.subr.mxu0 0.0
    %1293 = vmatpush1.msra.mxu0 0.0
    %1294 = vmatprep.subr.mxu0 0.0
    %1295 = vmatpush1.msra.mxu0 0.0
    %1296 = vmatprep.subr.mxu0 0.0
    %1297 = vmatpush1.msra.mxu0 0.0
    %1298 = vmatprep.subr.mxu0 0.0
    %1299 = vmatpush1.msra.mxu0 0.0
    %1300 = vmatprep.subr.mxu0 0.0
    %1301 = vmatpush1.msra.mxu0 0.0
    %1302 = vmatprep.subr.mxu0 0.0
    %1303 = vmatpush1.msra.mxu0 %v884
    %1304 = vmatprep.subr.mxu0 0.0
    %1305 = vmatpush1.msra.mxu0 %v879
    %1306 = vmatprep.subr.mxu0 0.0
    %1307 = vmatpush2.msra.mxu0 0.0
    %1308 = vmatprep.subr.mxu0 0.0
    %1309 = vmatpush2.msra.mxu0 0.0
    %1310 = vmatprep.subr.mxu0 0.0
    %1311 = vmatpush2.msra.mxu0 0.0
    %1312 = vmatprep.subr.mxu0 0.0
    %1313 = vmatpush2.msra.mxu0 0.0
    %1314 = vmatprep.subr.mxu0 0.0
    %1315 = vmatpush2.msra.mxu0 0.0
    %1316 = vmatprep.subr.mxu0 0.0
    %1317 = vmatpush2.msra.mxu0 0.0
    %1318 = vmatprep.subr.mxu0 0.0
    %1319 = vmatpush2.msra.mxu0 0.0
    %1320 = vmatprep.subr.mxu0 0.0
    %1321 = vmatpush2.msra.mxu0 0.0
    %1322 = vmatprep.subr.mxu0 0.0
    %1323 = vmatpush2.msra.mxu0 0.0
    %1324 = vmatprep.subr.mxu0 0.0
    %1325 = vmatpush2.msra.mxu0 0.0
    %1326 = vmatprep.subr.mxu0 0.0
    %1327 = vmatpush2.msra.mxu0 0.0
    %1328 = vmatprep.subr.mxu0 0.0
    %1329 = vmatpush2.msra.mxu0 0.0
    %1330 = vmatprep.subr.mxu0 0.0
    %1331 = vmatpush2.msra.mxu0 0.0
    %1332 = vmatprep.subr.mxu0 0.0
    %1333 = vmatpush2.msra.mxu0 0.0
    %1334 = vmatprep.subr.mxu0 0.0
    %1335 = vmatpush2.msra.mxu0 0.0
    %1336 = vmatprep.subr.mxu0 0.0
    %1337 = vmatpush2.msra.mxu0 0.0
    %1338 = vmatprep.mubr.f32.mxu0 0.0
    %1339 = vmatmul.mubr.f32.gmra.mxu0 %v1269
    %v1340 = vpop.f32.mrf.mxu0
    %v1341 = vadd.f32 %v1035, %v1340
    %v1342 = vpop.f32.mrf.mxu0
    %1343 = vmatprep.mubr.f32.mxu0 0.0
    %1344 = vmatmul.mubr.f32.gmra.mxu0 %v1272
    %v1345 = vpop.f32.mrf.mxu0
    %v1346 = vadd.f32 %v1040, %v1345
    %v1347 = vpop.f32.mrf.mxu0
    %1348 = vdwg.mxu0
    %v1350 = vsel %vm237, %v270, 0
    %v1353 = vsel %vm237, %v271, 0
    %1355 = vmatprep.subr.mxu0 0.0
    %1356 = vmatpush1.msra.mxu0 0.0
    %1357 = vmatprep.subr.mxu0 0.0
    %1358 = vmatpush1.msra.mxu0 0.0
    %1359 = vmatprep.subr.mxu0 0.0
    %1360 = vmatpush1.msra.mxu0 0.0
    %1361 = vmatprep.subr.mxu0 0.0
    %1362 = vmatpush1.msra.mxu0 0.0
    %1363 = vmatprep.subr.mxu0 0.0
    %1364 = vmatpush1.msra.mxu0 0.0
    %1365 = vmatprep.subr.mxu0 0.0
    %1366 = vmatpush1.msra.mxu0 0.0
    %1367 = vmatprep.subr.mxu0 0.0
    %1368 = vmatpush1.msra.mxu0 0.0
    %1369 = vmatprep.subr.mxu0 0.0
    %1370 = vmatpush1.msra.mxu0 0.0
    %1371 = vmatprep.subr.mxu0 0.0
    %1372 = vmatpush1.msra.mxu0 0.0
    %1373 = vmatprep.subr.mxu0 0.0
    %1374 = vmatpush1.msra.mxu0 0.0
    %1375 = vmatprep.subr.mxu0 0.0
    %1376 = vmatpush1.msra.mxu0 0.0
    %1377 = vmatprep.subr.mxu0 0.0
    %1378 = vmatpush1.msra.mxu0 0.0
    %1379 = vmatprep.subr.mxu0 0.0
    %1380 = vmatpush1.msra.mxu0 0.0
    %1381 = vmatprep.subr.mxu0 0.0
    %1382 = vmatpush1.msra.mxu0 0.0
    %1383 = vmatprep.subr.mxu0 0.0
    %1384 = vmatpush1.msra.mxu0 %v965
    %1385 = vmatprep.subr.mxu0 0.0
    %1386 = vmatpush1.msra.mxu0 %v960
    %1387 = vmatprep.subr.mxu0 0.0
    %1388 = vmatpush2.msra.mxu0 0.0
    %1389 = vmatprep.subr.mxu0 0.0
    %1390 = vmatpush2.msra.mxu0 0.0
    %1391 = vmatprep.subr.mxu0 0.0
    %1392 = vmatpush2.msra.mxu0 0.0
    %1393 = vmatprep.subr.mxu0 0.0
    %1394 = vmatpush2.msra.mxu0 0.0
    %1395 = vmatprep.subr.mxu0 0.0
    %1396 = vmatpush2.msra.mxu0 0.0
    %1397 = vmatprep.subr.mxu0 0.0
    %1398 = vmatpush2.msra.mxu0 0.0
    %1399 = vmatprep.subr.mxu0 0.0
    %1400 = vmatpush2.msra.mxu0 0.0
    %1401 = vmatprep.subr.mxu0 0.0
    %1402 = vmatpush2.msra.mxu0 0.0
    %1403 = vmatprep.subr.mxu0 0.0
    %1404 = vmatpush2.msra.mxu0 0.0
    %1405 = vmatprep.subr.mxu0 0.0
    %1406 = vmatpush2.msra.mxu0 0.0
    %1407 = vmatprep.subr.mxu0 0.0
    %1408 = vmatpush2.msra.mxu0 0.0
    %1409 = vmatprep.subr.mxu0 0.0
    %1410 = vmatpush2.msra.mxu0 0.0
    %1411 = vmatprep.subr.mxu0 0.0
    %1412 = vmatpush2.msra.mxu0 0.0
    %1413 = vmatprep.subr.mxu0 0.0
    %1414 = vmatpush2.msra.mxu0 0.0
    %1415 = vmatprep.subr.mxu0 0.0
    %1416 = vmatpush2.msra.mxu0 0.0
    %1417 = vmatprep.subr.mxu0 0.0
    %1418 = vmatpush2.msra.mxu0 0.0
    %1419 = vmatprep.mubr.f32.mxu0 0.0
    %1420 = vmatmul.mubr.f32.gmra.mxu0 %v1350
    %v1421 = vpop.f32.mrf.mxu0
    %v1422 = vadd.f32 %v1110, %v1421
    %v1423 = vpop.f32.mrf.mxu0
    %1424 = vmatprep.mubr.f32.mxu0 0.0
    %1425 = vmatmul.mubr.f32.gmra.mxu0 %v1353
    %v1426 = vpop.f32.mrf.mxu0
    %v1427 = vadd.f32 %v1115, %v1426
    %v1428 = vpop.f32.mrf.mxu0
    %1429 = vdwg.mxu0
    %v1431 = vsel %vm237, %v272, 0
    %v1434 = vsel %vm237, %v273, 0
    %1436 = vmatprep.subr.mxu0 0.0
    %1437 = vmatpush1.msra.mxu0 0.0
    %1438 = vmatprep.subr.mxu0 0.0
    %1439 = vmatpush1.msra.mxu0 0.0
    %1440 = vmatprep.subr.mxu0 0.0
    %1441 = vmatpush1.msra.mxu0 0.0
    %1442 = vmatprep.subr.mxu0 0.0
    %1443 = vmatpush1.msra.mxu0 0.0
    %1444 = vmatprep.subr.mxu0 0.0
    %1445 = vmatpush1.msra.mxu0 0.0
    %1446 = vmatprep.subr.mxu0 0.0
    %1447 = vmatpush1.msra.mxu0 0.0
    %1448 = vmatprep.subr.mxu0 0.0
    %1449 = vmatpush1.msra.mxu0 0.0
    %1450 = vmatprep.subr.mxu0 0.0
    %1451 = vmatpush1.msra.mxu0 0.0
    %1452 = vmatprep.subr.mxu0 0.0
    %1453 = vmatpush1.msra.mxu0 0.0
    %1454 = vmatprep.subr.mxu0 0.0
    %1455 = vmatpush1.msra.mxu0 0.0
    %1456 = vmatprep.subr.mxu0 0.0
    %1457 = vmatpush1.msra.mxu0 0.0
    %1458 = vmatprep.subr.mxu0 0.0
    %1459 = vmatpush1.msra.mxu0 0.0
    %1460 = vmatprep.subr.mxu0 0.0
    %1461 = vmatpush1.msra.mxu0 0.0
    %1462 = vmatprep.subr.mxu0 0.0
    %1463 = vmatpush1.msra.mxu0 0.0
    %1464 = vmatprep.subr.mxu0 0.0
    %1465 = vmatpush1.msra.mxu0 %v1190
    %1466 = vmatprep.subr.mxu0 0.0
    %1467 = vmatpush1.msra.mxu0 %v1185
    %1468 = vmatprep.subr.mxu0 0.0
    %1469 = vmatpush2.msra.mxu0 0.0
    %1470 = vmatprep.subr.mxu0 0.0
    %1471 = vmatpush2.msra.mxu0 0.0
    %1472 = vmatprep.subr.mxu0 0.0
    %1473 = vmatpush2.msra.mxu0 0.0
    %1474 = vmatprep.subr.mxu0 0.0
    %1475 = vmatpush2.msra.mxu0 0.0
    %1476 = vmatprep.subr.mxu0 0.0
    %1477 = vmatpush2.msra.mxu0 0.0
    %1478 = vmatprep.subr.mxu0 0.0
    %1479 = vmatpush2.msra.mxu0 0.0
    %1480 = vmatprep.subr.mxu0 0.0
    %1481 = vmatpush2.msra.mxu0 0.0
    %1482 = vmatprep.subr.mxu0 0.0
    %1483 = vmatpush2.msra.mxu0 0.0
    %1484 = vmatprep.subr.mxu0 0.0
    %1485 = vmatpush2.msra.mxu0 0.0
    %1486 = vmatprep.subr.mxu0 0.0
    %1487 = vmatpush2.msra.mxu0 0.0
    %1488 = vmatprep.subr.mxu0 0.0
    %1489 = vmatpush2.msra.mxu0 0.0
    %1490 = vmatprep.subr.mxu0 0.0
    %1491 = vmatpush2.msra.mxu0 0.0
    %1492 = vmatprep.subr.mxu0 0.0
    %1493 = vmatpush2.msra.mxu0 0.0
    %1494 = vmatprep.subr.mxu0 0.0
    %1495 = vmatpush2.msra.mxu0 0.0
    %1496 = vmatprep.subr.mxu0 0.0
    %1497 = vmatpush2.msra.mxu0 0.0
    %1498 = vmatprep.subr.mxu0 0.0
    %1499 = vmatpush2.msra.mxu0 0.0
    %1500 = vmatprep.mubr.f32.mxu0 0.0
    %1501 = vmatmul.mubr.f32.gmra.mxu0 %v1431
    %v1502 = vpop.f32.mrf.mxu0
    %v1503 = vadd.f32 0.0, %v1502
    %v1504 = vpop.f32.mrf.mxu0
    %1505 = vmatprep.mubr.f32.mxu0 0.0
    %1506 = vmatmul.mubr.f32.gmra.mxu0 %v1434
    %v1507 = vpop.f32.mrf.mxu0
    %v1508 = vadd.f32 0.0, %v1507
    %v1509 = vpop.f32.mrf.mxu0
    %1510 = vdwg.mxu0
    %v1512 = vsel %vm237, %v274, 0
    %v1515 = vsel %vm237, %v275, 0
    %1517 = vmatprep.subr.mxu0 0.0
    %1518 = vmatpush1.msra.mxu0 0.0
    %1519 = vmatprep.subr.mxu0 0.0
    %1520 = vmatpush1.msra.mxu0 0.0
    %1521 = vmatprep.subr.mxu0 0.0
    %1522 = vmatpush1.msra.mxu0 0.0
    %1523 = vmatprep.subr.mxu0 0.0
    %1524 = vmatpush1.msra.mxu0 0.0
    %1525 = vmatprep.subr.mxu0 0.0
    %1526 = vmatpush1.msra.mxu0 0.0
    %1527 = vmatprep.subr.mxu0 0.0
    %1528 = vmatpush1.msra.mxu0 0.0
    %1529 = vmatprep.subr.mxu0 0.0
    %1530 = vmatpush1.msra.mxu0 0.0
    %1531 = vmatprep.subr.mxu0 0.0
    %1532 = vmatpush1.msra.mxu0 0.0
    %1533 = vmatprep.subr.mxu0 0.0
    %1534 = vmatpush1.msra.mxu0 0.0
    %1535 = vmatprep.subr.mxu0 0.0
    %1536 = vmatpush1.msra.mxu0 0.0
    %1537 = vmatprep.subr.mxu0 0.0
    %1538 = vmatpush1.msra.mxu0 0.0
    %1539 = vmatprep.subr.mxu0 0.0
    %1540 = vmatpush1.msra.mxu0 0.0
    %1541 = vmatprep.subr.mxu0 0.0
    %1542 = vmatpush1.msra.mxu0 0.0
    %1543 = vmatprep.subr.mxu0 0.0
    %1544 = vmatpush1.msra.mxu0 0.0
    %1545 = vmatprep.subr.mxu0 0.0
    %1546 = vmatpush1.msra.mxu0 %v1265
    %1547 = vmatprep.subr.mxu0 0.0
    %1548 = vmatpush1.msra.mxu0 %v1260
    %1549 = vmatprep.subr.mxu0 0.0
    %1550 = vmatpush2.msra.mxu0 0.0
    %1551 = vmatprep.subr.mxu0 0.0
    %1552 = vmatpush2.msra.mxu0 0.0
    %1553 = vmatprep.subr.mxu0 0.0
    %1554 = vmatpush2.msra.mxu0 0.0
    %1555 = vmatprep.subr.mxu0 0.0
    %1556 = vmatpush2.msra.mxu0 0.0
    %1557 = vmatprep.subr.mxu0 0.0
    %1558 = vmatpush2.msra.mxu0 0.0
    %1559 = vmatprep.subr.mxu0 0.0
    %1560 = vmatpush2.msra.mxu0 0.0
    %1561 = vmatprep.subr.mxu0 0.0
    %1562 = vmatpush2.msra.mxu0 0.0
    %1563 = vmatprep.subr.mxu0 0.0
    %1564 = vmatpush2.msra.mxu0 0.0
    %1565 = vmatprep.subr.mxu0 0.0
    %1566 = vmatpush2.msra.mxu0 0.0
    %1567 = vmatprep.subr.mxu0 0.0
    %1568 = vmatpush2.msra.mxu0 0.0
    %1569 = vmatprep.subr.mxu0 0.0
    %1570 = vmatpush2.msra.mxu0 0.0
    %1571 = vmatprep.subr.mxu0 0.0
    %1572 = vmatpush2.msra.mxu0 0.0
    %1573 = vmatprep.subr.mxu0 0.0
    %1574 = vmatpush2.msra.mxu0 0.0
    %1575 = vmatprep.subr.mxu0 0.0
    %1576 = vmatpush2.msra.mxu0 0.0
    %1577 = vmatprep.subr.mxu0 0.0
    %1578 = vmatpush2.msra.mxu0 0.0
    %1579 = vmatprep.subr.mxu0 0.0
    %1580 = vmatpush2.msra.mxu0 0.0
    %1581 = vmatprep.mubr.f32.mxu0 0.0
    %1582 = vmatmul.mubr.f32.gmra.mxu0 %v1512
    %v1583 = vpop.f32.mrf.mxu0
    %v1584 = vadd.f32 0.0, %v1583
    %v1585 = vpop.f32.mrf.mxu0
    %1586 = vmatprep.mubr.f32.mxu0 0.0
    %1587 = vmatmul.mubr.f32.gmra.mxu0 %v1515
    %v1588 = vpop.f32.mrf.mxu0
    %v1589 = vadd.f32 0.0, %v1588
    %v1590 = vpop.f32.mrf.mxu0
    %1591 = vdwg.mxu0
    %v1592 = vadd.f32 %v1341, %v1503
    %v1593 = vadd.f32 %v1346, %v1508
    %v1594 = vadd.f32 %v1422, %v1584
    %v1595 = vadd.f32 %v1427, %v1589
    %v1596 = vstv %s276
    %v1597 = vadd.f32 %v1592, %v1596
    %v1598 = vadd.f32 %v1593, %v1596
    %v1599 = vadd.f32 %v1594, %v1596
    %v1600 = vadd.f32 %v1595, %v1596
    %v1601 = vxor.u32 %v1597, 2147483648
    %v1602 = vxor.u32 %v1598, 2147483648
    %v1603 = vxor.u32 %v1599, 2147483648
    %v1604 = vxor.u32 %v1600, 2147483648
    %v1605 = vmul.f32 %v1601, 1.442695
    %v1606 = vpow.pop %v1605
    %v1607 = vmul.f32 %v1602, 1.442695
    %v1608 = vpow.pop %v1607
    %v1609 = vmul.f32 %v1603, 1.442695
    %v1610 = vpow.pop %v1609
    %v1611 = vmul.f32 %v1604, 1.442695
    %v1612 = vpow.pop %v1611
    %v1613 = vadd.f32 %v1606, 1.0
    %v1614 = vadd.f32 %v1608, 1.0
    %v1615 = vadd.f32 %v1610, 1.0
    %v1616 = vadd.f32 %v1612, 1.0
    %v1617 = vrcp.pop %v1613
    %v1618 = vmul.f32 1.0, %v1617
    %v1619 = vrcp.pop %v1614
    %v1620 = vmul.f32 1.0, %v1619
    %v1621 = vrcp.pop %v1615
    %v1622 = vmul.f32 1.0, %v1621
    %v1623 = vrcp.pop %v1616
    %v1624 = vmul.f32 1.0, %v1623
    %1625 = vst.msk [vmem:[#allocation6] sm:$0xff] %vm237, %v1618
    %1626 = vst.msk [vmem:[#allocation6 + $0x8] sm:$0xff] %vm237, %v1620
    %1627 = vst.msk [vmem:[#allocation6 + $0x10] sm:$0xff] %vm237, %v1622
    %1628 = vst.msk [vmem:[#allocation6 + $0x18] sm:$0xff] %vm237, %v1624
    // Predicated region
    $region46: #{tpu_custom_call.1} parent=1 // pred_check
      _
    $region47: #{tpu_custom_call.1} parent=1 // pred_check_branch
      %1630 = sbr.rel (0) target = $region49
    $region48: #{tpu_custom_call.1} parent=1 // pred_region
      %s1632 = ssub.s32 512, 512
      %1633 = vsyncadd [#allocation7], %s1632
      %s1634 = sshll.u32 [#allocation6], 4
      %s1635 = int_to_ptr.vmem [resolvable:$true] %s1634
      %1640 = dma.vmem_to_hbm [thread:$0]  %s1635, 512, %s11, [#allocation7], 128, 128, 8
    $region49: #{tpu_custom_call.1} parent=1 // pred_fallthru
      _
    // Predicated region
    $region50: #{tpu_custom_call.1} parent=1 // pred_check
      _
    $region51: #{tpu_custom_call.1} parent=1 // pred_check_branch
      %1642 = sbr.rel (0) target = $region53
    $region52: #{tpu_custom_call.1} parent=1 // pred_region
      %1643 = dma.done [#allocation7], 512
    $region53: #{tpu_custom_call.1} parent=1 // pred_fallthru
      _
    %1644 = vsyncpa [#allocation7], 1

</llo_original>
